<compile_context>
chip_gen: v7x
topology: tpu7x:2x2x1
jax: 0.10.0
libtpu: 0.0.40
codegen_flags: <defaults>
</compile_context>

<pallas_src>
import math
import functools

import jax
import jax.numpy as jnp
from jax import lax
from jax.experimental import pallas as pl
from jax.experimental.pallas import tpu as pltpu

_LN_EPS = 1e-5


@functools.lru_cache(maxsize=None)
def _vmem_limit_bytes():
    # v7x has 64 MiB physical VMEM per TensorCore -> leave headroom; v5e/v6e have 128 MiB.
    try:
        cap = int(pltpu.get_tpu_info().vmem_capacity_bytes)
    except Exception:
        cap = 128 * 1024 * 1024
    return int(min(100 << 20, max(48 << 20, cap - (16 << 20))))


def _mosaic_params(dims):
    return pltpu.CompilerParams(dimension_semantics=dims,
                                vmem_limit_bytes=_vmem_limit_bytes())


def _pick_tile(n, candidates=(512, 256, 128, 64, 32, 16, 8)):
    for t in candidates:
        if n >= t and n % t == 0:
            return t
    return n


# ----------------------------------------------------------------------------- math helpers


def _erf_poly(z):
    # Abramowitz & Stegun 7.1.26 erf approximation, |error| <= 1.5e-7 (VPU/EUP ops only).
    a1, a2, a3, a4, a5 = 0.254829592, -0.284496736, 1.421413741, -1.453152027, 1.061405429
    p = 0.3275911
    sgn = jnp.where(z >= 0.0, 1.0, -1.0)
    az = jnp.abs(z)
    t = 1.0 / (1.0 + p * az)
    poly = ((((a5 * t + a4) * t + a3) * t + a2) * t + a1) * t
    return sgn * (1.0 - poly * jnp.exp(-az * az))


def _gelu_exact(x):
    # torch.nn.functional.gelu default = exact erf GELU.
    return 0.5 * x * (1.0 + _erf_poly(x * (1.0 / math.sqrt(2.0))))


def _layernorm_f32(x, w_row, b_row, eps):
    mu = jnp.mean(x, axis=-1, keepdims=True)
    var = jnp.mean(jnp.square(x - mu), axis=-1, keepdims=True)
    return (x - mu) * lax.rsqrt(var + eps) * w_row + b_row


# ----------------------------------------------------------------------------- spatial attention


def _spatial_attn_kernel(x_ref, kv_ref, lnw_ref, lnb_ref, wq_ref, wk_ref, wv_ref, wo_ref,
                         bo_ref, o_ref, q_scr, m_scr, l_scr, acc_scr,
                         *, heads, head_dim, eps, self_attn):
    ki = pl.program_id(2)
    nk = pl.num_programs(2)
    H, Dh = heads, head_dim

    @pl.when(ki == 0)
    def _():
        xq = x_ref[0].astype(jnp.float32)
        lnq = _layernorm_f32(xq, lnw_ref[...], lnb_ref[...], eps).astype(jnp.bfloat16)
        qf = jnp.dot(lnq, wq_ref[...], preferred_element_type=jnp.float32)  # scale folded in Wq
        q_scr[...] = jnp.stack([qf[:, h * Dh:(h + 1) * Dh] for h in range(H)],
                               axis=0).astype(jnp.bfloat16)
        m_scr[...] = jnp.full(m_scr.shape, -jnp.inf, dtype=m_scr.dtype)
        l_scr[...] = jnp.zeros(l_scr.shape, dtype=l_scr.dtype)
        acc_scr[...] = jnp.zeros(acc_scr.shape, dtype=acc_scr.dtype)

    # K/V source tile: LayerNorm(x) for self-attention, raw (un-normalized) context otherwise.
    if self_attn:
        kv = _layernorm_f32(kv_ref[0].astype(jnp.float32), lnw_ref[...], lnb_ref[...], eps)
        kv = kv.astype(jnp.bfloat16)
    else:
        kv = kv_ref[0].astype(jnp.bfloat16)

    # Lane-dense projections (N = E), then a cheap per-head lane-slice split.
    kf = jnp.dot(kv, wk_ref[...], preferred_element_type=jnp.float32).astype(jnp.bfloat16)
    vf = jnp.dot(kv, wv_ref[...], preferred_element_type=jnp.float32).astype(jnp.bfloat16)
    k3 = jnp.stack([kf[:, h * Dh:(h + 1) * Dh] for h in range(H)], axis=0)   # (H, tk, Dh)
    v3 = jnp.stack([vf[:, h * Dh:(h + 1) * Dh] for h in range(H)], axis=0)
    q3 = q_scr[...]                                                          # (H, tq, Dh)

    s = jnp.einsum('hqd,hkd->hqk', q3, k3, preferred_element_type=jnp.float32)

    # Online softmax update (f32 statistics).
    m_prev = m_scr[...]
    m_new = jnp.maximum(m_prev, jnp.max(s, axis=-1, keepdims=True))
    alpha = jnp.exp(m_prev - m_new)
    p = jnp.exp(s - m_new)
    l_scr[...] = alpha * l_scr[...] + jnp.sum(p, axis=-1, keepdims=True)
    acc_scr[...] = alpha * acc_scr[...] + jnp.einsum(
        'hqk,hkd->hqd', p.astype(jnp.bfloat16), v3, preferred_element_type=jnp.float32)
    m_scr[...] = m_new

    @pl.when(ki == nk - 1)
    def _():
        o = acc_scr[...] * pl.reciprocal(l_scr[...], approx=True)            # (H, tq, Dh)
        ob = o.astype(jnp.bfloat16)
        ocat = jnp.concatenate([ob[h] for h in range(H)], axis=-1)           # (tq, E)
        out = jnp.dot(ocat, wo_ref[...], preferred_element_type=jnp.float32)
        o_ref[0] = (out + bo_ref[...] + x_ref[0].astype(jnp.float32)).astype(o_ref.dtype)


def _ln_attn_spatial(x, ctx, lnw, lnb, wq, wk, wv, wo, bo, *, heads, head_dim,
                     self_attn, ctx_rep=1):
    BF, S, C = x.shape
    H, Dh = heads, head_dim
    E = H * Dh
    scale = Dh ** -0.5

    if self_attn:
        kv_arr, Sk, Ck = x, S, C
    else:
        kv_arr, Sk, Ck = ctx, ctx.shape[1], ctx.shape[2]

    tq = _pick_tile(S)
    tk = _pick_tile(Sk)
    nq, nk = S // tq, Sk // tk

    # Host-side weight packing (one-off layout plumbing, bf16 MXU operands).
    wqs = (wq * scale).astype(jnp.bfloat16)     # (C, E), softmax scale folded in
    wkb = wk.astype(jnp.bfloat16)               # (Ck, E)
    wvb = wv.astype(jnp.bfloat16)
    wob = wo.astype(jnp.bfloat16)               # (E, C)

    if self_attn:
        kv_map = lambda b, qi, ki: (b, ki, 0)
    else:
        rep = int(ctx_rep)
        kv_map = (lambda b, qi, ki: (b, ki, 0)) if rep == 1 else \
                 (lambda b, qi, ki: (b // rep, ki, 0))

    flops = BF * (2 * S * C * E + nq * 4 * Sk * Ck * E + 4 * H * S * Sk * Dh + 2 * S * E * C)
    transcend = BF * H * S * Sk
    kv_bytes = (S * C if self_attn else Sk * Ck) * 4
    bytes_acc = (2 * BF * S * C * 4 + BF * nq * kv_bytes
                 + 2 * (wqs.size + wkb.size + wvb.size + wob.size)
                 + 4 * (lnw.size + lnb.size + bo.size))

    kernel = functools.partial(_spatial_attn_kernel, heads=H, head_dim=Dh, eps=_LN_EPS,
                               self_attn=self_attn)
    return pl.pallas_call(
        kernel,
        out_shape=jax.ShapeDtypeStruct((BF, S, C), x.dtype),
        grid=(BF, nq, nk),
        in_specs=[
            pl.BlockSpec((1, tq, C), lambda b, qi, ki: (b, qi, 0)),     # query tile (raw x)
            pl.BlockSpec((1, tk, Ck), kv_map),                          # kv source tile
            pl.BlockSpec((1, C), lambda b, qi, ki: (0, 0)),             # LN weight
            pl.BlockSpec((1, C), lambda b, qi, ki: (0, 0)),             # LN bias
            pl.BlockSpec((C, E), lambda b, qi, ki: (0, 0)),             # Wq (scaled)
            pl.BlockSpec((Ck, E), lambda b, qi, ki: (0, 0)),            # Wk
            pl.BlockSpec((Ck, E), lambda b, qi, ki: (0, 0)),            # Wv
            pl.BlockSpec((E, C), lambda b, qi, ki: (0, 0)),             # Wo
            pl.BlockSpec((1, C), lambda b, qi, ki: (0, 0)),             # out bias
        ],
        out_specs=pl.BlockSpec((1, tq, C), lambda b, qi, ki: (b, qi, 0)),
        scratch_shapes=[
            pltpu.VMEM((H, tq, Dh), jnp.bfloat16),   # cached per-head q across kv steps
            pltpu.VMEM((H, tq, 1), jnp.float32),     # running max
            pltpu.VMEM((H, tq, 1), jnp.float32),     # running denom
            pltpu.VMEM((H, tq, Dh), jnp.float32),    # running numerator
        ],
        compiler_params=_mosaic_params(("parallel", "parallel", "arbitrary")),
        cost_estimate=pl.CostEstimate(flops=int(flops), transcendentals=int(transcend),
                                      bytes_accessed=int(bytes_acc)),
    )(x, kv_arr, lnw, lnb, wqs, wkb, wvb, wob, bo)


# ----------------------------------------------------------------------------- temporal attention


def _temporal_attn_kernel(x_ref, lnw_ref, lnb_ref, wq_ref, wk_ref, wv_ref, wo_ref, bo_ref,
                          o_ref, *, heads, head_dim, eps):
    # Block layout: (F, TB, C) = all frames of one batch element for TB spatial positions.
    F = x_ref.shape[0]
    H, Dh = heads, head_dim
    lnw = lnw_ref[...]
    lnb = lnb_ref[...]
    bo = bo_ref[...]

    x_f = [x_ref[f].astype(jnp.float32) for f in range(F)]                   # (TB, C) each
    xn_f = [_layernorm_f32(xf, lnw, lnb, eps).astype(jnp.bfloat16) for xf in x_f]

    # Lane-dense projections per frame (M = TB rows, N = E).  Scale folded into Wq.
    q_f = [jnp.dot(xn, wq_ref[...], preferred_element_type=jnp.float32).astype(jnp.bfloat16)
           for xn in xn_f]
    k_f = [jnp.dot(xn, wk_ref[...], preferred_element_type=jnp.float32).astype(jnp.bfloat16)
           for xn in xn_f]
    v_f = [jnp.dot(xn, wv_ref[...], preferred_element_type=jnp.float32).astype(jnp.bfloat16)
           for xn in xn_f]
    qF = jnp.stack(q_f, axis=1)                                              # (TB, F, E)
    kF = jnp.stack(k_f, axis=1)
    vF = jnp.stack(v_f, axis=1)

    o_heads = []
    for h in range(H):
        sl = slice(h * Dh, (h + 1) * Dh)
        s = jnp.einsum('tfd,tgd->tfg', qF[:, :, sl], kF[:, :, sl],
                       preferred_element_type=jnp.float32)                   # (TB, F, F)
        s = s - jnp.max(s, axis=-1, keepdims=True)
        p = jnp.exp(s)
        p = p * pl.reciprocal(jnp.sum(p, axis=-1, keepdims=True), approx=True)
        o_heads.append(jnp.einsum('tfg,tgd->tfd', p.astype(jnp.bfloat16), vF[:, :, sl],
                                  preferred_element_type=jnp.float32).astype(jnp.bfloat16))
    ocat = jnp.concatenate(o_heads, axis=-1)                                 # (TB, F, E)

    for f in range(F):
        out_f = jnp.dot(ocat[:, f, :], wo_ref[...], preferred_element_type=jnp.float32)
        o_ref[f] = (out_f + bo + x_f[f]).astype(o_ref.dtype)


def _ln_attn_temporal(x, lnw, lnb, wq, wk, wv, wo, bo, *, heads, head_dim, num_frames):
    BF, S, C = x.shape
    F = num_frames
    B = BF // F
    H, Dh = heads, head_dim
    E = H * Dh
    scale = Dh ** -0.5

    TB = _pick_tile(S, (128, 64, 32, 16, 8))
    nr = S // TB

    wqs = (wq * scale).astype(jnp.bfloat16)
    wkb = wk.astype(jnp.bfloat16)
    wvb = wv.astype(jnp.bfloat16)
    wob = wo.astype(jnp.bfloat16)

    flops = BF * S * (6 * C * E + 2 * E * C) + B * S * 4 * H * F * F * Dh
    transcend = B * S * H * F * F
    bytes_acc = (2 * BF * S * C * 4 + 2 * (wqs.size + wkb.size + wvb.size + wob.size)
                 + 4 * (lnw.size + lnb.size + bo.size))

    kernel = functools.partial(_temporal_attn_kernel, heads=H, head_dim=Dh, eps=_LN_EPS)
    return pl.pallas_call(
        kernel,
        out_shape=jax.ShapeDtypeStruct((BF, S, C), x.dtype),
        grid=(B, nr),
        in_specs=[
            # (F, TB, C) block of the (B*F, S, C) tensor == '(b f) s c -> (b s) f c'
            # rearrange folded into the BlockSpec (no HBM transpose round trips).
            pl.BlockSpec((F, TB, C), lambda b, si: (b, si, 0)),
            pl.BlockSpec((1, C), lambda b, si: (0, 0)),
            pl.BlockSpec((1, C), lambda b, si: (0, 0)),
            pl.BlockSpec((C, E), lambda b, si: (0, 0)),
            pl.BlockSpec((C, E), lambda b, si: (0, 0)),
            pl.BlockSpec((C, E), lambda b, si: (0, 0)),
            pl.BlockSpec((E, C), lambda b, si: (0, 0)),
            pl.BlockSpec((1, C), lambda b, si: (0, 0)),
        ],
        out_specs=pl.BlockSpec((F, TB, C), lambda b, si: (b, si, 0)),
        compiler_params=_mosaic_params(("parallel", "parallel")),
        cost_estimate=pl.CostEstimate(flops=int(flops), transcendentals=int(transcend),
                                      bytes_accessed=int(bytes_acc)),
    )(x, lnw, lnb, wqs, wkb, wvb, wob, bo)


# ----------------------------------------------------------------------------- feed-forward


def _ln_ff_kernel(x_ref, lnw_ref, lnb_ref, w1h_ref, w1g_ref, b1h_ref, b1g_ref, w2_ref,
                  b2_ref, o_ref, acc_ref, xn_ref, *, eps):
    j = pl.program_id(2)
    nj = pl.num_programs(2)

    @pl.when(j == 0)
    def _():
        xn = _layernorm_f32(x_ref[0].astype(jnp.float32), lnw_ref[...], lnb_ref[...], eps)
        xn_ref[...] = xn.astype(jnp.bfloat16)            # cache LN(x) across inner chunks
        acc_ref[...] = jnp.zeros(acc_ref.shape, dtype=acc_ref.dtype)

    xnb = xn_ref[...]
    ph = jnp.dot(xnb, w1h_ref[0], preferred_element_type=jnp.float32) + b1h_ref[0]
    pg = jnp.dot(xnb, w1g_ref[0], preferred_element_type=jnp.float32) + b1g_ref[0]
    g = ph * _gelu_exact(pg)                              # GEGLU on this inner chunk (f32)
    acc_ref[...] += jnp.dot(g.astype(jnp.bfloat16), w2_ref[0],
                            preferred_element_type=jnp.float32)

    @pl.when(j == nj - 1)
    def _():
        o_ref[0] = (acc_ref[...] + b2_ref[...] + x_ref[0].astype(jnp.float32)).astype(o_ref.dtype)


def _ff_inner_tile(inner):
    # Largest 128-multiple divisor of `inner` (capped), else the full inner dim.
    if inner % 128 != 0:
        return inner
    best, t = 128, 128
    while t <= min(inner, 2048):
        if inner % t == 0:
            best = t
        t += 128
    return best


def _ln_ff_call(x, lnw, lnb, w1, b1, w2, b2):
    BF, S, C = x.shape
    inner = w1.shape[1] // 2
    tin = _ff_inner_tile(inner)
    nc = inner // tin
    tr = _pick_tile(S)
    nr = S // tr

    # Split GEGLU projection into value / gate halves, chunk the inner dim, bf16 weights.
    w1h = w1[:, :inner].reshape(C, nc, tin).transpose(1, 0, 2).astype(jnp.bfloat16)
    w1g = w1[:, inner:].reshape(C, nc, tin).transpose(1, 0, 2).astype(jnp.bfloat16)
    b1h = b1[:, :inner].reshape(1, nc, tin).transpose(1, 0, 2)
    b1g = b1[:, inner:].reshape(1, nc, tin).transpose(1, 0, 2)
    w2c = w2.reshape(nc, tin, C).astype(jnp.bfloat16)

    flops = BF * 6 * S * C * inner
    transcend = BF * S * inner
    bytes_acc = (2 * BF * S * C * 4
                 + BF * nr * 2 * (w1h.size + w1g.size + w2c.size)
                 + 4 * (b1h.size + b1g.size + b2.size + lnw.size + lnb.size))

    return pl.pallas_call(
        functools.partial(_ln_ff_kernel, eps=_LN_EPS),
        out_shape=jax.ShapeDtypeStruct((BF, S, C), x.dtype),
        grid=(BF, nr, nc),
        in_specs=[
            pl.BlockSpec((1, tr, C), lambda b, r, j: (b, r, 0)),
            pl.BlockSpec((1, C), lambda b, r, j: (0, 0)),
            pl.BlockSpec((1, C), lambda b, r, j: (0, 0)),
            pl.BlockSpec((1, C, tin), lambda b, r, j: (j, 0, 0)),    # W1 value chunk
            pl.BlockSpec((1, C, tin), lambda b, r, j: (j, 0, 0)),    # W1 gate chunk
            pl.BlockSpec((1, 1, tin), lambda b, r, j: (j, 0, 0)),    # b1 value chunk
            pl.BlockSpec((1, 1, tin), lambda b, r, j: (j, 0, 0)),    # b1 gate chunk
            pl.BlockSpec((1, tin, C), lambda b, r, j: (j, 0, 0)),    # W2 chunk
            pl.BlockSpec((1, C), lambda b, r, j: (0, 0)),
        ],
        out_specs=pl.BlockSpec((1, tr, C), lambda b, r, j: (b, r, 0)),
        scratch_shapes=[pltpu.VMEM((tr, C), jnp.float32),    # f32 output accumulator
                        pltpu.VMEM((tr, C), jnp.bfloat16)],  # cached LayerNorm(x)
        compiler_params=_mosaic_params(("parallel", "parallel", "arbitrary")),
        cost_estimate=pl.CostEstimate(flops=int(flops), transcendentals=int(transcend),
                                      bytes_accessed=int(bytes_acc)),
    )(x, lnw, lnb, w1h, w1g, b1h, b1g, w2c, b2)


# ----------------------------------------------------------------------------- block forward


def basic_transformer_block_pseudo3d(params, hidden_states, context=None, num_frames=None,
                                     *, heads, head_dim):
    """Mirrors BasicTransformerBlockPseudo3D.forward (eval mode, dropout=0)."""
    # self-attention
    h = _ln_attn_spatial(hidden_states, None, *params["norm1"], *params["attn1"],
                         heads=heads, head_dim=head_dim, self_attn=True)
    # cross-attention (falls back to self-attention semantics if context is None)
    if context is not None:
        ctx_rep = num_frames if num_frames is not None else 1   # repeat_interleave folded
        h = _ln_attn_spatial(h, context, *params["norm2"], *params["attn2"],
                             heads=heads, head_dim=head_dim, self_attn=False,
                             ctx_rep=ctx_rep)
    else:
        h = _ln_attn_spatial(h, None, *params["norm2"], *params["attn2"],
                             heads=heads, head_dim=head_dim, self_attn=True)
    # temporal self-attention over frames (rearrange folded into BlockSpec)
    if num_frames is not None:
        h = _ln_attn_temporal(h, *params["norm_temporal"], *params["attn_temporal"],
                              heads=heads, head_dim=head_dim, num_frames=num_frames)
    # feed-forward (GEGLU)
    h = _ln_ff_call(h, *params["norm3"], *params["ff"])
    return h


# ----------------------------------------------------------------------------- params


def init_params(key, dim, heads, head_dim, cross_dim, ff_mult=4):
    """Deterministic synthetic init. Linear weights stored as (in, out) (transposed vs
    torch's (out, in)); q/k/v have no bias (attention_bias=False)."""
    inner = heads * head_dim
    ff_inner = dim * ff_mult
    ks = jax.random.split(key, 32)

    def w(k, shape, scale=0.05):
        return (scale * jax.random.normal(k, shape)).astype(jnp.float32)

    def ln(k, d):
        kw, kb = jax.random.split(k)
        return ((1.0 + 0.1 * jax.random.normal(kw, (1, d))).astype(jnp.float32),
                (0.1 * jax.random.normal(kb, (1, d))).astype(jnp.float32))

    def attn(k, kv_dim):
        k0, k1, k2, k3, k4 = jax.random.split(k, 5)
        return (w(k0, (dim, inner)),        # wq
                w(k1, (kv_dim, inner)),     # wk
                w(k2, (kv_dim, inner)),     # wv
                w(k3, (inner, dim)),        # wo
                w(k4, (1, dim)))            # bo

    return {
        "norm1": ln(ks[0], dim),
        "attn1": attn(ks[1], dim),
        "norm2": ln(ks[2], dim),
        "attn2": attn(ks[3], cross_dim),
        "norm_temporal": ln(ks[4], dim),
        "attn_temporal": attn(ks[5], dim),
        "norm3": ln(ks[6], dim),
        "ff": (w(ks[7], (dim, 2 * ff_inner)), w(ks[8], (1, 2 * ff_inner)),
               w(ks[9], (ff_inner, dim)), w(ks[10], (1, dim))),
    }


# ----------------------------------------------------------------------------- pure-JAX reference


def _layernorm_ref(x, w, b):
    mu = x.mean(-1, keepdims=True)
    var = jnp.square(x - mu).mean(-1, keepdims=True)
    return (x - mu) / jnp.sqrt(var + _LN_EPS) * w + b


def _attention_ref(xq, kv, wq, wk, wv, wo, bo, *, heads, head_dim):
    q, k, v = xq @ wq, kv @ wk, kv @ wv
    B, Sq, E = q.shape
    Sk = k.shape[1]
    qh = q.reshape(B, Sq, heads, head_dim).transpose(0, 2, 1, 3)
    kh = k.reshape(B, Sk, heads, head_dim).transpose(0, 2, 1, 3)
    vh = v.reshape(B, Sk, heads, head_dim).transpose(0, 2, 1, 3)
    s = jnp.einsum("bhqd,bhkd->bhqk", qh, kh) * (head_dim ** -0.5)
    p = jax.nn.softmax(s, axis=-1)
    o = jnp.einsum("bhqk,bhkd->bhqd", p, vh)
    o = o.transpose(0, 2, 1, 3).reshape(B, Sq, E)
    return o @ wo + bo


def _block_ref(params, hidden, context, num_frames, *, heads, head_dim):
    if context is not None and num_frames is not None:
        context = jnp.repeat(context, num_frames, axis=0)
    n = _layernorm_ref(hidden, *params["norm1"])
    hidden = _attention_ref(n, n, *params["attn1"], heads=heads, head_dim=head_dim) + hidden
    n = _layernorm_ref(hidden, *params["norm2"])
    kv = context if context is not None else n
    hidden = _attention_ref(n, kv, *params["attn2"], heads=heads, head_dim=head_dim) + hidden
    if num_frames is not None:
        bf, s, c = hidden.shape
        b = bf // num_frames
        hidden = hidden.reshape(b, num_frames, s, c).transpose(0, 2, 1, 3).reshape(b * s, num_frames, c)
        n = _layernorm_ref(hidden, *params["norm_temporal"])
        hidden = _attention_ref(n, n, *params["attn_temporal"], heads=heads, head_dim=head_dim) + hidden
        hidden = hidden.reshape(b, s, num_frames, c).transpose(0, 2, 1, 3).reshape(bf, s, c)
    n = _layernorm_ref(hidden, *params["norm3"])
    w1, b1, w2, b2 = params["ff"]
    proj = n @ w1 + b1
    half = proj.shape[-1] // 2
    ff = (proj[..., :half] * jax.nn.gelu(proj[..., half:], approximate=False)) @ w2 + b2
    return ff + hidden


# ----------------------------------------------------------------------------- main


if __name__ == "__main__":
    dim, heads, head_dim = 64, 2, 32           # inner_dim = heads*head_dim = dim
    cross_dim = 96
    batch, num_frames, seq, ctx_seq = 2, 2, 24, 16   # seq=24 -> tq=tk=8 exercises flash tiling

    key = jax.random.PRNGKey(0)
    kp, kh, kc = jax.random.split(key, 3)
    params = init_params(kp, dim, heads, head_dim, cross_dim)

    hidden = jax.random.normal(kh, (batch * num_frames, seq, dim), dtype=jnp.float32)
    context = jax.random.normal(kc, (batch, ctx_seq, cross_dim), dtype=jnp.float32)

    out = basic_transformer_block_pseudo3d(params, hidden, context, num_frames,
                                           heads=heads, head_dim=head_dim)
    out = jax.block_until_ready(out)

    ref = _block_ref(params, hidden, context, num_frames, heads=heads, head_dim=head_dim)
    assert out.shape == hidden.shape, (out.shape, hidden.shape)
    max_err = float(jnp.max(jnp.abs(out - ref)))
    # bf16 MXU operands + approx reciprocal vs a pure-f32 reference -> looser tolerance.
    assert max_err < 5e-2, f"max abs error vs reference: {max_err}"

    print("KERNEL_OK")
</pallas_src>

<mosaic_0001>
module attributes {stable_mosaic.version = 11 : i64} {
  func.func @_spatial_attn_kernel(%arg0: i32, %arg1: i32, %arg2: i32, %arg3: memref<1x8x64xf32, #tpu.memory_space<vmem>>, %arg4: memref<1x8x64xf32, #tpu.memory_space<vmem>>, %arg5: memref<1x64xf32, #tpu.memory_space<vmem>>, %arg6: memref<1x64xf32, #tpu.memory_space<vmem>>, %arg7: memref<64x64xbf16, #tpu.memory_space<vmem>>, %arg8: memref<64x64xbf16, #tpu.memory_space<vmem>>, %arg9: memref<64x64xbf16, #tpu.memory_space<vmem>>, %arg10: memref<64x64xbf16, #tpu.memory_space<vmem>>, %arg11: memref<1x64xf32, #tpu.memory_space<vmem>>, %arg12: memref<1x8x64xf32, #tpu.memory_space<vmem>>, %arg13: memref<2x8x32xbf16, #tpu.memory_space<vmem>>, %arg14: memref<2x8x1xf32, #tpu.memory_space<vmem>>, %arg15: memref<2x8x1xf32, #tpu.memory_space<vmem>>, %arg16: memref<2x8x32xf32, #tpu.memory_space<vmem>>) attributes {dimension_semantics = [#tpu.dimension_semantics<parallel>, #tpu.dimension_semantics<parallel>, #tpu.dimension_semantics<arbitrary>], iteration_bounds = array<i64: 4, 3, 3>, scalar_prefetch = 0 : i64, scratch_operands = 4 : i64, tpu.core_type = #tpu.core_type<tc>, window_params = [{transform_indices = @transform_0, window_bounds = array<i64: 1, 8, 64>}, {transform_indices = @transform_1, window_bounds = array<i64: 1, 8, 64>}, {pipeline_mode = #tpu.pipeline_mode<synchronous>, transform_indices = @transform_2, window_bounds = array<i64: 1, 64>}, {pipeline_mode = #tpu.pipeline_mode<synchronous>, transform_indices = @transform_3, window_bounds = array<i64: 1, 64>}, {pipeline_mode = #tpu.pipeline_mode<synchronous>, transform_indices = @transform_4, window_bounds = array<i64: 64, 64>}, {pipeline_mode = #tpu.pipeline_mode<synchronous>, transform_indices = @transform_5, window_bounds = array<i64: 64, 64>}, {pipeline_mode = #tpu.pipeline_mode<synchronous>, transform_indices = @transform_6, window_bounds = array<i64: 64, 64>}, {pipeline_mode = #tpu.pipeline_mode<synchronous>, transform_indices = @transform_7, window_bounds = array<i64: 64, 64>}, {pipeline_mode = #tpu.pipeline_mode<synchronous>, transform_indices = @transform_8, window_bounds = array<i64: 1, 64>}, {transform_indices = @transform_9, window_bounds = array<i64: 1, 8, 64>}]} {
    %c0_i32 = arith.constant 0 : i32
    %0 = arith.cmpi eq, %arg2, %c0_i32 : i32
    %1 = arith.extui %0 : i1 to i32
    %c0_i32_0 = arith.constant 0 : i32
    %2 = arith.cmpi ne, %1, %c0_i32_0 : i32
    scf.if %2 {
      %c0_43 = arith.constant 0 : index
      %c0_44 = arith.constant 0 : index
      %c0_45 = arith.constant 0 : index
      %74 = vector.load %arg3[%c0_43, %c0_44, %c0_45] : memref<1x8x64xf32, #tpu.memory_space<vmem>>, vector<1x8x64xf32>
      %75 = vector.shape_cast %74 : vector<1x8x64xf32> to vector<8x64xf32>
      %c0_46 = arith.constant 0 : index
      %c0_47 = arith.constant 0 : index
      %76 = vector.load %arg5[%c0_46, %c0_47] : memref<1x64xf32, #tpu.memory_space<vmem>>, vector<1x64xf32>
      %c0_48 = arith.constant 0 : index
      %c0_49 = arith.constant 0 : index
      %77 = vector.load %arg6[%c0_48, %c0_49] : memref<1x64xf32, #tpu.memory_space<vmem>>, vector<1x64xf32>
      %cst_50 = arith.constant dense<0.000000e+00> : vector<8xf32>
      %78 = vector.multi_reduction <add>, %75, %cst_50 [1] : vector<8x64xf32> to vector<8xf32>
      %79 = vector.shape_cast %78 : vector<8xf32> to vector<8x1xf32>
      %cst_51 = arith.constant 6.400000e+01 : f32
      %80 = vector.broadcast %cst_51 : f32 to vector<8x1xf32>
      %81 = arith.divf %79, %80 : vector<8x1xf32>
      %82 = vector.broadcast %81 : vector<8x1xf32> to vector<8x64xf32>
      %83 = arith.subf %75, %82 : vector<8x64xf32>
      %84 = arith.mulf %83, %83 : vector<8x64xf32>
      %cst_52 = arith.constant dense<0.000000e+00> : vector<8xf32>
      %85 = vector.multi_reduction <add>, %84, %cst_52 [1] : vector<8x64xf32> to vector<8xf32>
      %86 = vector.shape_cast %85 : vector<8xf32> to vector<8x1xf32>
      %cst_53 = arith.constant 6.400000e+01 : f32
      %87 = vector.broadcast %cst_53 : f32 to vector<8x1xf32>
      %88 = arith.divf %86, %87 : vector<8x1xf32>
      %89 = vector.broadcast %81 : vector<8x1xf32> to vector<8x64xf32>
      %90 = arith.subf %75, %89 : vector<8x64xf32>
      %cst_54 = arith.constant 9.99999974E-6 : f32
      %91 = vector.broadcast %cst_54 : f32 to vector<8x1xf32>
      %92 = arith.addf %88, %91 : vector<8x1xf32>
      %93 = math.rsqrt %92 : vector<8x1xf32>
      %94 = vector.broadcast %93 : vector<8x1xf32> to vector<8x64xf32>
      %95 = arith.mulf %90, %94 : vector<8x64xf32>
      %96 = vector.broadcast %76 : vector<1x64xf32> to vector<8x64xf32>
      %97 = arith.mulf %95, %96 : vector<8x64xf32>
      %98 = vector.broadcast %77 : vector<1x64xf32> to vector<8x64xf32>
      %99 = arith.addf %97, %98 : vector<8x64xf32>
      %100 = arith.truncf %99 : vector<8x64xf32> to vector<8x64xbf16>
      %c0_55 = arith.constant 0 : index
      %c0_56 = arith.constant 0 : index
      %101 = vector.load %arg7[%c0_55, %c0_56] : memref<64x64xbf16, #tpu.memory_space<vmem>>, vector<64x64xbf16>
      %cst_57 = arith.constant dense<0.000000e+00> : vector<8x64xf32>
      %102 = tpu.matmul %100, %101, %cst_57 {dimension_numbers = #tpu.dot_dimension_numbers<[1], [0], [0], [1], [0, 0, 1, 1], [], []>} : vector<8x64xbf16>, vector<64x64xbf16>, vector<8x64xf32> -> vector<8x64xf32>
      %103 = vector.extract_strided_slice %102 {offsets = [0, 0], sizes = [8, 32], strides = [1, 1]} : vector<8x64xf32> to vector<8x32xf32>
      %104 = vector.extract_strided_slice %102 {offsets = [0, 32], sizes = [8, 32], strides = [1, 1]} : vector<8x64xf32> to vector<8x32xf32>
      %105 = vector.shape_cast %103 : vector<8x32xf32> to vector<1x8x32xf32>
      %106 = vector.shape_cast %104 : vector<8x32xf32> to vector<1x8x32xf32>
      %107 = tpu.concatenate %105, %106 in 0 : vector<1x8x32xf32>, vector<1x8x32xf32> -> vector<2x8x32xf32>
      %108 = arith.truncf %107 : vector<2x8x32xf32> to vector<2x8x32xbf16>
      %c0_58 = arith.constant 0 : index
      %c0_59 = arith.constant 0 : index
      %c0_60 = arith.constant 0 : index
      %109 = vector.load %arg13[%c0_58, %c0_59, %c0_60] : memref<2x8x32xbf16, #tpu.memory_space<vmem>>, vector<2x8x32xbf16>
      tpu.vector_store %arg13[%c0_58, %c0_59, %c0_60], %108 {strides = array<i32>} : memref<2x8x32xbf16, #tpu.memory_space<vmem>>, vector<2x8x32xbf16>,
      %cst_61 = arith.constant 0xFF800000 : f32
      %110 = vector.broadcast %cst_61 : f32 to vector<2x8x1xf32>
      %c0_62 = arith.constant 0 : index
      %c0_63 = arith.constant 0 : index
      %c0_64 = arith.constant 0 : index
      %111 = vector.load %arg14[%c0_62, %c0_63, %c0_64] : memref<2x8x1xf32, #tpu.memory_space<vmem>>, vector<2x8x1xf32>
      tpu.vector_store %arg14[%c0_62, %c0_63, %c0_64], %110 {strides = array<i32>} : memref<2x8x1xf32, #tpu.memory_space<vmem>>, vector<2x8x1xf32>,
      %cst_65 = arith.constant 0.000000e+00 : f32
      %112 = vector.broadcast %cst_65 : f32 to vector<2x8x1xf32>
      %c0_66 = arith.constant 0 : index
      %c0_67 = arith.constant 0 : index
      %c0_68 = arith.constant 0 : index
      %113 = vector.load %arg15[%c0_66, %c0_67, %c0_68] : memref<2x8x1xf32, #tpu.memory_space<vmem>>, vector<2x8x1xf32>
      tpu.vector_store %arg15[%c0_66, %c0_67, %c0_68], %112 {strides = array<i32>} : memref<2x8x1xf32, #tpu.memory_space<vmem>>, vector<2x8x1xf32>,
      %cst_69 = arith.constant 0.000000e+00 : f32
      %114 = vector.broadcast %cst_69 : f32 to vector<2x8x32xf32>
      %c0_70 = arith.constant 0 : index
      %c0_71 = arith.constant 0 : index
      %c0_72 = arith.constant 0 : index
      %115 = vector.load %arg16[%c0_70, %c0_71, %c0_72] : memref<2x8x32xf32, #tpu.memory_space<vmem>>, vector<2x8x32xf32>
      tpu.vector_store %arg16[%c0_70, %c0_71, %c0_72], %114 {strides = array<i32>} : memref<2x8x32xf32, #tpu.memory_space<vmem>>, vector<2x8x32xf32>,
    } else {
    }
    %c0 = arith.constant 0 : index
    %c0_1 = arith.constant 0 : index
    %c0_2 = arith.constant 0 : index
    %3 = vector.load %arg4[%c0, %c0_1, %c0_2] : memref<1x8x64xf32, #tpu.memory_space<vmem>>, vector<1x8x64xf32>
    %4 = vector.shape_cast %3 : vector<1x8x64xf32> to vector<8x64xf32>
    %c0_3 = arith.constant 0 : index
    %c0_4 = arith.constant 0 : index
    %5 = vector.load %arg5[%c0_3, %c0_4] : memref<1x64xf32, #tpu.memory_space<vmem>>, vector<1x64xf32>
    %c0_5 = arith.constant 0 : index
    %c0_6 = arith.constant 0 : index
    %6 = vector.load %arg6[%c0_5, %c0_6] : memref<1x64xf32, #tpu.memory_space<vmem>>, vector<1x64xf32>
    %cst = arith.constant dense<0.000000e+00> : vector<8xf32>
    %7 = vector.multi_reduction <add>, %4, %cst [1] : vector<8x64xf32> to vector<8xf32>
    %8 = vector.shape_cast %7 : vector<8xf32> to vector<8x1xf32>
    %cst_7 = arith.constant 6.400000e+01 : f32
    %9 = vector.broadcast %cst_7 : f32 to vector<8x1xf32>
    %10 = arith.divf %8, %9 : vector<8x1xf32>
    %11 = vector.broadcast %10 : vector<8x1xf32> to vector<8x64xf32>
    %12 = arith.subf %4, %11 : vector<8x64xf32>
    %13 = arith.mulf %12, %12 : vector<8x64xf32>
    %cst_8 = arith.constant dense<0.000000e+00> : vector<8xf32>
    %14 = vector.multi_reduction <add>, %13, %cst_8 [1] : vector<8x64xf32> to vector<8xf32>
    %15 = vector.shape_cast %14 : vector<8xf32> to vector<8x1xf32>
    %cst_9 = arith.constant 6.400000e+01 : f32
    %16 = vector.broadcast %cst_9 : f32 to vector<8x1xf32>
    %17 = arith.divf %15, %16 : vector<8x1xf32>
    %18 = vector.broadcast %10 : vector<8x1xf32> to vector<8x64xf32>
    %19 = arith.subf %4, %18 : vector<8x64xf32>
    %cst_10 = arith.constant 9.99999974E-6 : f32
    %20 = vector.broadcast %cst_10 : f32 to vector<8x1xf32>
    %21 = arith.addf %17, %20 : vector<8x1xf32>
    %22 = math.rsqrt %21 : vector<8x1xf32>
    %23 = vector.broadcast %22 : vector<8x1xf32> to vector<8x64xf32>
    %24 = arith.mulf %19, %23 : vector<8x64xf32>
    %25 = vector.broadcast %5 : vector<1x64xf32> to vector<8x64xf32>
    %26 = arith.mulf %24, %25 : vector<8x64xf32>
    %27 = vector.broadcast %6 : vector<1x64xf32> to vector<8x64xf32>
    %28 = arith.addf %26, %27 : vector<8x64xf32>
    %29 = arith.truncf %28 : vector<8x64xf32> to vector<8x64xbf16>
    %c0_11 = arith.constant 0 : index
    %c0_12 = arith.constant 0 : index
    %30 = vector.load %arg8[%c0_11, %c0_12] : memref<64x64xbf16, #tpu.memory_space<vmem>>, vector<64x64xbf16>
    %cst_13 = arith.constant dense<0.000000e+00> : vector<8x64xf32>
    %31 = tpu.matmul %29, %30, %cst_13 {dimension_numbers = #tpu.dot_dimension_numbers<[1], [0], [0], [1], [0, 0, 1, 1], [], []>} : vector<8x64xbf16>, vector<64x64xbf16>, vector<8x64xf32> -> vector<8x64xf32>
    %32 = arith.truncf %31 : vector<8x64xf32> to vector<8x64xbf16>
    %c0_14 = arith.constant 0 : index
    %c0_15 = arith.constant 0 : index
    %33 = vector.load %arg9[%c0_14, %c0_15] : memref<64x64xbf16, #tpu.memory_space<vmem>>, vector<64x64xbf16>
    %cst_16 = arith.constant dense<0.000000e+00> : vector<8x64xf32>
    %34 = tpu.matmul %29, %33, %cst_16 {dimension_numbers = #tpu.dot_dimension_numbers<[1], [0], [0], [1], [0, 0, 1, 1], [], []>} : vector<8x64xbf16>, vector<64x64xbf16>, vector<8x64xf32> -> vector<8x64xf32>
    %35 = arith.truncf %34 : vector<8x64xf32> to vector<8x64xbf16>
    %36 = vector.extract_strided_slice %32 {offsets = [0, 0], sizes = [8, 32], strides = [1, 1]} : vector<8x64xbf16> to vector<8x32xbf16>
    %37 = vector.extract_strided_slice %32 {offsets = [0, 32], sizes = [8, 32], strides = [1, 1]} : vector<8x64xbf16> to vector<8x32xbf16>
    %38 = vector.shape_cast %36 : vector<8x32xbf16> to vector<1x8x32xbf16>
    %39 = vector.shape_cast %37 : vector<8x32xbf16> to vector<1x8x32xbf16>
    %40 = tpu.concatenate %38, %39 in 0 : vector<1x8x32xbf16>, vector<1x8x32xbf16> -> vector<2x8x32xbf16>
    %41 = vector.extract_strided_slice %35 {offsets = [0, 0], sizes = [8, 32], strides = [1, 1]} : vector<8x64xbf16> to vector<8x32xbf16>
    %42 = vector.extract_strided_slice %35 {offsets = [0, 32], sizes = [8, 32], strides = [1, 1]} : vector<8x64xbf16> to vector<8x32xbf16>
    %43 = vector.shape_cast %41 : vector<8x32xbf16> to vector<1x8x32xbf16>
    %44 = vector.shape_cast %42 : vector<8x32xbf16> to vector<1x8x32xbf16>
    %45 = tpu.concatenate %43, %44 in 0 : vector<1x8x32xbf16>, vector<1x8x32xbf16> -> vector<2x8x32xbf16>
    %c0_17 = arith.constant 0 : index
    %c0_18 = arith.constant 0 : index
    %c0_19 = arith.constant 0 : index
    %46 = vector.load %arg13[%c0_17, %c0_18, %c0_19] : memref<2x8x32xbf16, #tpu.memory_space<vmem>>, vector<2x8x32xbf16>
    "tpu.trace_start"() <{level = 10 : i32, message = "hqd,hkd->hqk"}> : () -> ()
    %cst_20 = arith.constant dense<0.000000e+00> : vector<2x8x8xf32>
    %47 = tpu.matmul %46, %40, %cst_20 {dimension_numbers = #tpu.dot_dimension_numbers<[2], [2], [1], [1], [0, 0, 0, 1, 1, 1], [0], [0]>} : vector<2x8x32xbf16>, vector<2x8x32xbf16>, vector<2x8x8xf32> -> vector<2x8x8xf32>
    "tpu.trace_stop"() : () -> ()
    %c0_21 = arith.constant 0 : index
    %c0_22 = arith.constant 0 : index
    %c0_23 = arith.constant 0 : index
    %48 = vector.load %arg14[%c0_21, %c0_22, %c0_23] : memref<2x8x1xf32, #tpu.memory_space<vmem>>, vector<2x8x1xf32>
    %cst_24 = arith.constant dense<0xFF800000> : vector<2x8xf32>
    %49 = vector.multi_reduction <maximumf>, %47, %cst_24 [2] : vector<2x8x8xf32> to vector<2x8xf32>
    %50 = vector.shape_cast %49 : vector<2x8xf32> to vector<2x8x1xf32>
    %51 = arith.maximumf %48, %50 : vector<2x8x1xf32>
    %52 = arith.subf %48, %51 : vector<2x8x1xf32>
    %53 = math.exp %52 : vector<2x8x1xf32>
    %54 = vector.broadcast %51 : vector<2x8x1xf32> to vector<2x8x8xf32>
    %55 = arith.subf %47, %54 : vector<2x8x8xf32>
    %56 = math.exp %55 : vector<2x8x8xf32>
    %c0_25 = arith.constant 0 : index
    %c0_26 = arith.constant 0 : index
    %c0_27 = arith.constant 0 : index
    %57 = vector.load %arg15[%c0_25, %c0_26, %c0_27] : memref<2x8x1xf32, #tpu.memory_space<vmem>>, vector<2x8x1xf32>
    %58 = arith.mulf %53, %57 : vector<2x8x1xf32>
    %cst_28 = arith.constant dense<0.000000e+00> : vector<2x8xf32>
    %59 = vector.multi_reduction <add>, %56, %cst_28 [2] : vector<2x8x8xf32> to vector<2x8xf32>
    %60 = vector.shape_cast %59 : vector<2x8xf32> to vector<2x8x1xf32>
    %61 = arith.addf %58, %60 : vector<2x8x1xf32>
    %c0_29 = arith.constant 0 : index
    %c0_30 = arith.constant 0 : index
    %c0_31 = arith.constant 0 : index
    %62 = vector.load %arg15[%c0_29, %c0_30, %c0_31] : memref<2x8x1xf32, #tpu.memory_space<vmem>>, vector<2x8x1xf32>
    tpu.vector_store %arg15[%c0_29, %c0_30, %c0_31], %61 {strides = array<i32>} : memref<2x8x1xf32, #tpu.memory_space<vmem>>, vector<2x8x1xf32>,
    %c0_32 = arith.constant 0 : index
    %c0_33 = arith.constant 0 : index
    %c0_34 = arith.constant 0 : index
    %63 = vector.load %arg16[%c0_32, %c0_33, %c0_34] : memref<2x8x32xf32, #tpu.memory_space<vmem>>, vector<2x8x32xf32>
    %64 = vector.broadcast %53 : vector<2x8x1xf32> to vector<2x8x32xf32>
    %65 = arith.mulf %64, %63 : vector<2x8x32xf32>
    %66 = arith.truncf %56 : vector<2x8x8xf32> to vector<2x8x8xbf16>
    "tpu.trace_start"() <{level = 10 : i32, message = "hqk,hkd->hqd"}> : () -> ()
    %cst_35 = arith.constant dense<0.000000e+00> : vector<2x8x32xf32>
    %67 = tpu.matmul %66, %45, %cst_35 {dimension_numbers = #tpu.dot_dimension_numbers<[2], [1], [1], [2], [0, 0, 0, 1, 1, 2], [0], [0]>} : vector<2x8x8xbf16>, vector<2x8x32xbf16>, vector<2x8x32xf32> -> vector<2x8x32xf32>
    "tpu.trace_stop"() : () -> ()
    %68 = arith.addf %65, %67 : vector<2x8x32xf32>
    %c0_36 = arith.constant 0 : index
    %c0_37 = arith.constant 0 : index
    %c0_38 = arith.constant 0 : index
    %69 = vector.load %arg16[%c0_36, %c0_37, %c0_38] : memref<2x8x32xf32, #tpu.memory_space<vmem>>, vector<2x8x32xf32>
    tpu.vector_store %arg16[%c0_36, %c0_37, %c0_38], %68 {strides = array<i32>} : memref<2x8x32xf32, #tpu.memory_space<vmem>>, vector<2x8x32xf32>,
    %c0_39 = arith.constant 0 : index
    %c0_40 = arith.constant 0 : index
    %c0_41 = arith.constant 0 : index
    %70 = vector.load %arg14[%c0_39, %c0_40, %c0_41] : memref<2x8x1xf32, #tpu.memory_space<vmem>>, vector<2x8x1xf32>
    tpu.vector_store %arg14[%c0_39, %c0_40, %c0_41], %51 {strides = array<i32>} : memref<2x8x1xf32, #tpu.memory_space<vmem>>, vector<2x8x1xf32>,
    %c2_i32 = arith.constant 2 : i32
    %71 = arith.cmpi eq, %arg2, %c2_i32 : i32
    %72 = arith.extui %71 : i1 to i32
    %c0_i32_42 = arith.constant 0 : i32
    %73 = arith.cmpi ne, %72, %c0_i32_42 : i32
    scf.if %73 {
      %c0_43 = arith.constant 0 : index
      %c0_44 = arith.constant 0 : index
      %c0_45 = arith.constant 0 : index
      %74 = vector.load %arg16[%c0_43, %c0_44, %c0_45] : memref<2x8x32xf32, #tpu.memory_space<vmem>>, vector<2x8x32xf32>
      %c0_46 = arith.constant 0 : index
      %c0_47 = arith.constant 0 : index
      %c0_48 = arith.constant 0 : index
      %75 = vector.load %arg15[%c0_46, %c0_47, %c0_48] : memref<2x8x1xf32, #tpu.memory_space<vmem>>, vector<2x8x1xf32>
      %76 = tpu.reciprocal %75 {approx = true} : vector<2x8x1xf32> -> vector<2x8x1xf32>
      %77 = vector.broadcast %76 : vector<2x8x1xf32> to vector<2x8x32xf32>
      %78 = arith.mulf %74, %77 : vector<2x8x32xf32>
      %79 = arith.truncf %78 : vector<2x8x32xf32> to vector<2x8x32xbf16>
      %80 = vector.extract_strided_slice %79 {offsets = [0, 0, 0], sizes = [1, 8, 32], strides = [1, 1, 1]} : vector<2x8x32xbf16> to vector<1x8x32xbf16>
      %81 = vector.shape_cast %80 : vector<1x8x32xbf16> to vector<8x32xbf16>
      %82 = vector.extract_strided_slice %79 {offsets = [1, 0, 0], sizes = [1, 8, 32], strides = [1, 1, 1]} : vector<2x8x32xbf16> to vector<1x8x32xbf16>
      %83 = vector.shape_cast %82 : vector<1x8x32xbf16> to vector<8x32xbf16>
      %84 = tpu.concatenate %81, %83 in 1 : vector<8x32xbf16>, vector<8x32xbf16> -> vector<8x64xbf16>
      %c0_49 = arith.constant 0 : index
      %c0_50 = arith.constant 0 : index
      %85 = vector.load %arg10[%c0_49, %c0_50] : memref<64x64xbf16, #tpu.memory_space<vmem>>, vector<64x64xbf16>
      %cst_51 = arith.constant dense<0.000000e+00> : vector<8x64xf32>
      %86 = tpu.matmul %84, %85, %cst_51 {dimension_numbers = #tpu.dot_dimension_numbers<[1], [0], [0], [1], [0, 0, 1, 1], [], []>} : vector<8x64xbf16>, vector<64x64xbf16>, vector<8x64xf32> -> vector<8x64xf32>
      %c0_52 = arith.constant 0 : index
      %c0_53 = arith.constant 0 : index
      %87 = vector.load %arg11[%c0_52, %c0_53] : memref<1x64xf32, #tpu.memory_space<vmem>>, vector<1x64xf32>
      %88 = vector.broadcast %87 : vector<1x64xf32> to vector<8x64xf32>
      %89 = arith.addf %86, %88 : vector<8x64xf32>
      %c0_54 = arith.constant 0 : index
      %c0_55 = arith.constant 0 : index
      %c0_56 = arith.constant 0 : index
      %90 = vector.load %arg3[%c0_54, %c0_55, %c0_56] : memref<1x8x64xf32, #tpu.memory_space<vmem>>, vector<1x8x64xf32>
      %91 = vector.shape_cast %90 : vector<1x8x64xf32> to vector<8x64xf32>
      %92 = arith.addf %89, %91 : vector<8x64xf32>
      %c0_57 = arith.constant 0 : index
      %c0_58 = arith.constant 0 : index
      %c0_59 = arith.constant 0 : index
      %93 = vector.load %arg12[%c0_57, %c0_58, %c0_59] : memref<1x8x64xf32, #tpu.memory_space<vmem>>, vector<1x8x64xf32>
      %94 = vector.shape_cast %93 : vector<1x8x64xf32> to vector<8x64xf32>
      %95 = vector.shape_cast %92 : vector<8x64xf32> to vector<1x8x64xf32>
      tpu.vector_store %arg12[%c0_57, %c0_58, %c0_59], %95 {strides = array<i32>} : memref<1x8x64xf32, #tpu.memory_space<vmem>>, vector<1x8x64xf32>,
    } else {
    }
    return
  }
  func.func @transform_0(%arg0: i32, %arg1: i32, %arg2: i32) -> (i32, i32, i32) {
    %c0_i32 = arith.constant 0 : i32
    %c0_i32_0 = arith.constant 0 : i32
    return %arg0, %arg1, %c0_i32 : i32, i32, i32
  }
  func.func @transform_1(%arg0: i32, %arg1: i32, %arg2: i32) -> (i32, i32, i32) {
    %c0_i32 = arith.constant 0 : i32
    %c0_i32_0 = arith.constant 0 : i32
    return %arg0, %arg2, %c0_i32 : i32, i32, i32
  }
  func.func @transform_2(%arg0: i32, %arg1: i32, %arg2: i32) -> (i32, i32) {
    %c0_i32 = arith.constant 0 : i32
    %c0_i32_0 = arith.constant 0 : i32
    %c0_i32_1 = arith.constant 0 : i32
    return %c0_i32, %c0_i32_0 : i32, i32
  }
  func.func @transform_3(%arg0: i32, %arg1: i32, %arg2: i32) -> (i32, i32) {
    %c0_i32 = arith.constant 0 : i32
    %c0_i32_0 = arith.constant 0 : i32
    %c0_i32_1 = arith.constant 0 : i32
    return %c0_i32, %c0_i32_0 : i32, i32
  }
  func.func @transform_4(%arg0: i32, %arg1: i32, %arg2: i32) -> (i32, i32) {
    %c0_i32 = arith.constant 0 : i32
    %c0_i32_0 = arith.constant 0 : i32
    %c0_i32_1 = arith.constant 0 : i32
    return %c0_i32, %c0_i32_0 : i32, i32
  }
  func.func @transform_5(%arg0: i32, %arg1: i32, %arg2: i32) -> (i32, i32) {
    %c0_i32 = arith.constant 0 : i32
    %c0_i32_0 = arith.constant 0 : i32
    %c0_i32_1 = arith.constant 0 : i32
    return %c0_i32, %c0_i32_0 : i32, i32
  }
  func.func @transform_6(%arg0: i32, %arg1: i32, %arg2: i32) -> (i32, i32) {
    %c0_i32 = arith.constant 0 : i32
    %c0_i32_0 = arith.constant 0 : i32
    %c0_i32_1 = arith.constant 0 : i32
    return %c0_i32, %c0_i32_0 : i32, i32
  }
  func.func @transform_7(%arg0: i32, %arg1: i32, %arg2: i32) -> (i32, i32) {
    %c0_i32 = arith.constant 0 : i32
    %c0_i32_0 = arith.constant 0 : i32
    %c0_i32_1 = arith.constant 0 : i32
    return %c0_i32, %c0_i32_0 : i32, i32
  }
  func.func @transform_8(%arg0: i32, %arg1: i32, %arg2: i32) -> (i32, i32) {
    %c0_i32 = arith.constant 0 : i32
    %c0_i32_0 = arith.constant 0 : i32
    %c0_i32_1 = arith.constant 0 : i32
    return %c0_i32, %c0_i32_0 : i32, i32
  }
  func.func @transform_9(%arg0: i32, %arg1: i32, %arg2: i32) -> (i32, i32, i32) {
    %c0_i32 = arith.constant 0 : i32
    %c0_i32_0 = arith.constant 0 : i32
    return %arg0, %arg1, %c0_i32 : i32, i32, i32
  }
}

</mosaic_0001>

<llo_original>
// kernel: tpu_custom_call.1
$region0: #{tpu_custom_call.1}
  #allocation0 [shape = 'u32[]', space=smem, size = 0x4, offset = 0x4, fixed_abs, tag = 'smem constant byte address 0x4 - core index']
  #allocation1 [shape = 'u32[144,128]{1,0:T(1,128)}', space=vmem, size = 0x12000, scoped, tag = 'internal scratch']
  #allocation2 [shape = 'bf16[2,8,32]{2,1,0:T(8,128)(2,1)}', space=vmem, size = 0x1000, scoped, tag = 'scratch operand']
  #allocation3 [shape = 'f32[2,8,1]{2,1,0:T(8,128)}', space=vmem, size = 0x2000, scoped, tag = 'scratch operand']
  #allocation4 [shape = 'f32[2,8,1]{2,1,0:T(8,128)}', space=vmem, size = 0x2000, scoped, tag = 'scratch operand']
  #allocation5 [shape = 'f32[2,8,32]{2,1,0:T(8,128)}', space=vmem, size = 0x2000, scoped, tag = 'scratch operand']
  %s0 = inlined_call_operand.hbm [shape: f32[4,24,64], index: 0, kind: input, shape index: {}]
  %s1 = inlined_call_operand.hbm [shape: f32[4,24,64], index: 1, kind: input, shape index: {}]
  %s2 = inlined_call_operand.hbm [shape: f32[1,64], index: 2, kind: input, shape index: {}]
  %s3 = inlined_call_operand.hbm [shape: f32[1,64], index: 3, kind: input, shape index: {}]
  %s4 = inlined_call_operand.hbm [shape: bf16[64,64], index: 4, kind: input, shape index: {}]
  %s5 = inlined_call_operand.hbm [shape: bf16[64,64], index: 5, kind: input, shape index: {}]
  %s6 = inlined_call_operand.hbm [shape: bf16[64,64], index: 6, kind: input, shape index: {}]
  %s7 = inlined_call_operand.hbm [shape: bf16[64,64], index: 7, kind: input, shape index: {}]
  %s8 = inlined_call_operand.hbm [shape: f32[1,64], index: 8, kind: input, shape index: {}]
  %s9 = inlined_call_operand.hbm [shape: f32[4,24,64], index: 9, kind: output, shape index: {}]
  %s10 = sld [smem:[#allocation0]]
  $region113: #{tpu_custom_call.1} parent=0
    _
  %s12 = ssub.s32 1, %s10
  %s13 = scalar_select 0, %s12, %s10
  $region1: #{tpu_custom_call.1} parent=0
    #allocation6 [shape = 'u8[8192]{0}', space=vmem, size = 0x2000, scoped, tag = 'input window, operand 0']
    #allocation7 [shape = 's32[2]{0}', space=sflag, size = 0x8, scoped, tag = 'scoped memory for tpu_custom_call.1']
    #allocation8 [shape = 's32[2]{0}', space=sflag, size = 0x8, scoped, tag = 'scoped memory for tpu_custom_call.1']
    #allocation9 [shape = 'u8[8192]{0}', space=vmem, size = 0x2000, scoped, tag = 'input window, operand 1']
    #allocation10 [shape = 's32[2]{0}', space=sflag, size = 0x8, scoped, tag = 'scoped memory for tpu_custom_call.1']
    #allocation11 [shape = 'u8[512]{0}', space=vmem, size = 0x400, scoped, tag = 'input window, operand 2, single buffered']
    #allocation12 [shape = 'u8[512]{0}', space=vmem, size = 0x400, scoped, tag = 'input window, operand 3, single buffered']
    #allocation13 [shape = 's32[1]{0}', space=sflag, size = 0x4, scoped, tag = 'scoped memory for tpu_custom_call.1']
    #allocation14 [shape = 'u8[16384]{0}', space=vmem, size = 0x4000, scoped, tag = 'input window, operand 4, single buffered']
    #allocation15 [shape = 'u8[16384]{0}', space=vmem, size = 0x4000, scoped, tag = 'input window, operand 5, single buffered']
    #allocation16 [shape = 's32[1]{0}', space=sflag, size = 0x4, scoped, tag = 'scoped memory for tpu_custom_call.1']
    #allocation17 [shape = 'u8[16384]{0}', space=vmem, size = 0x4000, scoped, tag = 'input window, operand 6, single buffered']
    #allocation18 [shape = 'u8[16384]{0}', space=vmem, size = 0x4000, scoped, tag = 'input window, operand 7, single buffered']
    #allocation19 [shape = 's32[1]{0}', space=sflag, size = 0x4, scoped, tag = 'scoped memory for tpu_custom_call.1']
    #allocation20 [shape = 'u8[512]{0}', space=vmem, size = 0x400, scoped, tag = 'input window, operand 8, single buffered']
    #allocation21 [shape = 'u8[8192]{0}', space=vmem, size = 0x2000, scoped, tag = 'output window, operand 0']
    %14 = vsyncpa [#allocation7], 0
    %s15 = scalar_lea.sflag [#allocation7], 1
    %16 = vsyncpa %s15, 0
    %17 = vsyncpa [#allocation10], 0
    %s18 = scalar_lea.sflag [#allocation10], 1
    %19 = vsyncpa %s18, 0
    %20 = vsyncpa [#allocation13], 0
    %21 = vsyncpa [#allocation16], 0
    %22 = vsyncpa [#allocation19], 0
    %23 = vsyncpa [#allocation8], 0
    %s24 = scalar_lea.sflag [#allocation8], 1
    %25 = vsyncpa %s24, 0
    loop: start=0, step=1, limit=38
    $region2: #{tpu_custom_call.1} parent=1 // loop_pre_header
      _
    $region3: #{tpu_custom_call.1} parent=1 // loop_header
      %s27 = sphi 0, %s31
      %p28 = scmp.ge.s32.totalorder %s27, 38
      %s34 = sphi 0, %s53
      %s35 = sphi 0, %s49
      %s36 = sphi 0, %s45
      %s37 = sphi 0, %s34
      %s38 = sphi 0, %s35
      %s39 = sphi 0, %s36
      %s40 = sphi 0, %s37
      %s41 = sphi 0, %s38
      %s42 = sphi 0, %s39
      %s58 = sphi 0, %s60
      %s61 = sphi 0, %s58
      %s62 = sphi 0, %s61
      %s78 = sphi 0, %s62
      %s86 = sphi 0, %s88
      %s89 = sphi 0, %s86
      %s90 = sphi 0, %s89
      %s106 = sphi 0, %s90
      %s110 = sphi 0, %s110
      %s112 = sphi 0, %s110
      %s113 = sphi 0, %s112
      %s127 = sphi 0, %s113
      %s131 = sphi 0, %s131
      %s133 = sphi 0, %s131
      %s134 = sphi 0, %s133
      %s148 = sphi 0, %s134
      %s152 = sphi 0, %s152
      %s154 = sphi 0, %s152
      %s155 = sphi 0, %s154
      %s169 = sphi 0, %s155
      %s173 = sphi 0, %s173
      %s175 = sphi 0, %s173
      %s176 = sphi 0, %s175
      %s190 = sphi 0, %s176
      %s194 = sphi 0, %s194
      %s196 = sphi 0, %s194
      %s197 = sphi 0, %s196
      %s211 = sphi 0, %s197
      %s215 = sphi 0, %s215
      %s217 = sphi 0, %s215
      %s218 = sphi 0, %s217
      %s232 = sphi 0, %s218
      %s236 = sphi 0, %s236
      %s238 = sphi 0, %s236
      %s239 = sphi 0, %s238
      %s253 = sphi 0, %s239
      %s261 = sphi 0, %s263
      %s264 = sphi 0, %s261
      %s265 = sphi 0, %s264
      %s281 = sphi 0, %s265
    $region4: #{tpu_custom_call.1} parent=1 // loop_header_branch
      %30 = sbr.rel (%p28) target = $region8
    $region5: #{tpu_custom_call.1} parent=1 // loop_body
      %s32 = ssub.s32 %s27, 1
      %s33 = ssub.s32 %s27, 2
      %s43 = sadd.s32 1, %s36
      %p44 = scmp.ge.s32.totalorder %s43, 3
      %s45 = scalar_select %p44, 0, %s43
      %s46 = sadd.s32 1, %s35
      %s47 = scalar_select %p44, %s46, %s35
      %p48 = scmp.ge.s32.totalorder %s47, 3
      %s49 = scalar_select %p48, 0, %s47
      %s50 = sadd.s32 1, %s34
      %s51 = scalar_select %p48, %s50, %s34
      %p52 = scmp.ge.s32.totalorder %s51, 4
      %s53 = scalar_select %p52, 0, %s51
      %s54 = ssub.s32 %s34, %s53
      %s55 = ssub.s32 %s35, %s49
      %s56 = sor.u32 %s54, %s55
      %p57 = scmp.eq.s32.totalorder %s56, 0
      %s59 = sadd.s32 %s58, 1
      %s60 = scalar_select %p57, %s58, %s59
      %p63 = pneg %p57
      %p64 = scmp.eq.s32.totalorder %s27, 35
      %p65 = por %p63, %p64
      %p66 = scmp.ne.s32.totalorder %s58, %s61
      %p67 = scmp.eq.s32.totalorder %s27, 0
      %p68 = por %p66, %p67
      %p69 = scmp.ne.s32.totalorder %s58, %s61
      %p70 = scmp.eq.s32.totalorder %s32, 35
      %p71 = por %p69, %p70
      %p72 = scmp.ne.s32.totalorder %s61, %s62
      %p73 = scmp.eq.s32.totalorder %s32, 0
      %p74 = por %p72, %p73
      %p75 = scmp.ne.s32.totalorder %s61, %s62
      %p76 = scmp.eq.s32.totalorder %s33, 35
      %p77 = por %p75, %p76
      %p79 = scmp.ne.s32.totalorder %s62, %s78
      %p80 = scmp.eq.s32.totalorder %s33, 0
      %p81 = por %p79, %p80
      %s82 = ssub.s32 %s34, %s53
      %s83 = ssub.s32 %s36, %s45
      %s84 = sor.u32 %s82, %s83
      %p85 = scmp.eq.s32.totalorder %s84, 0
      %s87 = sadd.s32 %s86, 1
      %s88 = scalar_select %p85, %s86, %s87
      %p91 = pneg %p85
      %p92 = scmp.eq.s32.totalorder %s27, 35
      %p93 = por %p91, %p92
      %p94 = scmp.ne.s32.totalorder %s86, %s89
      %p95 = scmp.eq.s32.totalorder %s27, 0
      %p96 = por %p94, %p95
      %p97 = scmp.ne.s32.totalorder %s86, %s89
      %p98 = scmp.eq.s32.totalorder %s32, 35
      %p99 = por %p97, %p98
      %p100 = scmp.ne.s32.totalorder %s89, %s90
      %p101 = scmp.eq.s32.totalorder %s32, 0
      %p102 = por %p100, %p101
      %p103 = scmp.ne.s32.totalorder %s89, %s90
      %p104 = scmp.eq.s32.totalorder %s33, 35
      %p105 = por %p103, %p104
      %p107 = scmp.ne.s32.totalorder %s90, %s106
      %p108 = scmp.eq.s32.totalorder %s33, 0
      %p109 = por %p107, %p108
      %s111 = sadd.s32 %s110, 1
      %p114 = scmp.eq.s32.totalorder %s27, 35
      %p115 = scmp.ne.s32.totalorder %s110, %s112
      %p116 = scmp.eq.s32.totalorder %s27, 0
      %p117 = por %p115, %p116
      %p118 = scmp.ne.s32.totalorder %s110, %s112
      %p119 = scmp.eq.s32.totalorder %s32, 35
      %p120 = por %p118, %p119
      %p121 = scmp.ne.s32.totalorder %s112, %s113
      %p122 = scmp.eq.s32.totalorder %s32, 0
      %p123 = por %p121, %p122
      %p124 = scmp.ne.s32.totalorder %s112, %s113
      %p125 = scmp.eq.s32.totalorder %s33, 35
      %p126 = por %p124, %p125
      %p128 = scmp.ne.s32.totalorder %s113, %s127
      %p129 = scmp.eq.s32.totalorder %s33, 0
      %p130 = por %p128, %p129
      %s132 = sadd.s32 %s131, 1
      %p135 = scmp.eq.s32.totalorder %s27, 35
      %p136 = scmp.ne.s32.totalorder %s131, %s133
      %p137 = scmp.eq.s32.totalorder %s27, 0
      %p138 = por %p136, %p137
      %p139 = scmp.ne.s32.totalorder %s131, %s133
      %p140 = scmp.eq.s32.totalorder %s32, 35
      %p141 = por %p139, %p140
      %p142 = scmp.ne.s32.totalorder %s133, %s134
      %p143 = scmp.eq.s32.totalorder %s32, 0
      %p144 = por %p142, %p143
      %p145 = scmp.ne.s32.totalorder %s133, %s134
      %p146 = scmp.eq.s32.totalorder %s33, 35
      %p147 = por %p145, %p146
      %p149 = scmp.ne.s32.totalorder %s134, %s148
      %p150 = scmp.eq.s32.totalorder %s33, 0
      %p151 = por %p149, %p150
      %s153 = sadd.s32 %s152, 1
      %p156 = scmp.eq.s32.totalorder %s27, 35
      %p157 = scmp.ne.s32.totalorder %s152, %s154
      %p158 = scmp.eq.s32.totalorder %s27, 0
      %p159 = por %p157, %p158
      %p160 = scmp.ne.s32.totalorder %s152, %s154
      %p161 = scmp.eq.s32.totalorder %s32, 35
      %p162 = por %p160, %p161
      %p163 = scmp.ne.s32.totalorder %s154, %s155
      %p164 = scmp.eq.s32.totalorder %s32, 0
      %p165 = por %p163, %p164
      %p166 = scmp.ne.s32.totalorder %s154, %s155
      %p167 = scmp.eq.s32.totalorder %s33, 35
      %p168 = por %p166, %p167
      %p170 = scmp.ne.s32.totalorder %s155, %s169
      %p171 = scmp.eq.s32.totalorder %s33, 0
      %p172 = por %p170, %p171
      %s174 = sadd.s32 %s173, 1
      %p177 = scmp.eq.s32.totalorder %s27, 35
      %p178 = scmp.ne.s32.totalorder %s173, %s175
      %p179 = scmp.eq.s32.totalorder %s27, 0
      %p180 = por %p178, %p179
      %p181 = scmp.ne.s32.totalorder %s173, %s175
      %p182 = scmp.eq.s32.totalorder %s32, 35
      %p183 = por %p181, %p182
      %p184 = scmp.ne.s32.totalorder %s175, %s176
      %p185 = scmp.eq.s32.totalorder %s32, 0
      %p186 = por %p184, %p185
      %p187 = scmp.ne.s32.totalorder %s175, %s176
      %p188 = scmp.eq.s32.totalorder %s33, 35
      %p189 = por %p187, %p188
      %p191 = scmp.ne.s32.totalorder %s176, %s190
      %p192 = scmp.eq.s32.totalorder %s33, 0
      %p193 = por %p191, %p192
      %s195 = sadd.s32 %s194, 1
      %p198 = scmp.eq.s32.totalorder %s27, 35
      %p199 = scmp.ne.s32.totalorder %s194, %s196
      %p200 = scmp.eq.s32.totalorder %s27, 0
      %p201 = por %p199, %p200
      %p202 = scmp.ne.s32.totalorder %s194, %s196
      %p203 = scmp.eq.s32.totalorder %s32, 35
      %p204 = por %p202, %p203
      %p205 = scmp.ne.s32.totalorder %s196, %s197
      %p206 = scmp.eq.s32.totalorder %s32, 0
      %p207 = por %p205, %p206
      %p208 = scmp.ne.s32.totalorder %s196, %s197
      %p209 = scmp.eq.s32.totalorder %s33, 35
      %p210 = por %p208, %p209
      %p212 = scmp.ne.s32.totalorder %s197, %s211
      %p213 = scmp.eq.s32.totalorder %s33, 0
      %p214 = por %p212, %p213
      %s216 = sadd.s32 %s215, 1
      %p219 = scmp.eq.s32.totalorder %s27, 35
      %p220 = scmp.ne.s32.totalorder %s215, %s217
      %p221 = scmp.eq.s32.totalorder %s27, 0
      %p222 = por %p220, %p221
      %p223 = scmp.ne.s32.totalorder %s215, %s217
      %p224 = scmp.eq.s32.totalorder %s32, 35
      %p225 = por %p223, %p224
      %p226 = scmp.ne.s32.totalorder %s217, %s218
      %p227 = scmp.eq.s32.totalorder %s32, 0
      %p228 = por %p226, %p227
      %p229 = scmp.ne.s32.totalorder %s217, %s218
      %p230 = scmp.eq.s32.totalorder %s33, 35
      %p231 = por %p229, %p230
      %p233 = scmp.ne.s32.totalorder %s218, %s232
      %p234 = scmp.eq.s32.totalorder %s33, 0
      %p235 = por %p233, %p234
      %s237 = sadd.s32 %s236, 1
      %p240 = scmp.eq.s32.totalorder %s27, 35
      %p241 = scmp.ne.s32.totalorder %s236, %s238
      %p242 = scmp.eq.s32.totalorder %s27, 0
      %p243 = por %p241, %p242
      %p244 = scmp.ne.s32.totalorder %s236, %s238
      %p245 = scmp.eq.s32.totalorder %s32, 35
      %p246 = por %p244, %p245
      %p247 = scmp.ne.s32.totalorder %s238, %s239
      %p248 = scmp.eq.s32.totalorder %s32, 0
      %p249 = por %p247, %p248
      %p250 = scmp.ne.s32.totalorder %s238, %s239
      %p251 = scmp.eq.s32.totalorder %s33, 35
      %p252 = por %p250, %p251
      %p254 = scmp.ne.s32.totalorder %s239, %s253
      %p255 = scmp.eq.s32.totalorder %s33, 0
      %p256 = por %p254, %p255
      %s257 = ssub.s32 %s34, %s53
      %s258 = ssub.s32 %s35, %s49
      %s259 = sor.u32 %s257, %s258
      %p260 = scmp.eq.s32.totalorder %s259, 0
      %s262 = sadd.s32 %s261, 1
      %s263 = scalar_select %p260, %s261, %s262
      %p266 = pneg %p260
      %p267 = scmp.eq.s32.totalorder %s27, 35
      %p268 = por %p266, %p267
      %p269 = scmp.ne.s32.totalorder %s261, %s264
      %p270 = scmp.eq.s32.totalorder %s27, 0
      %p271 = por %p269, %p270
      %p272 = scmp.ne.s32.totalorder %s261, %s264
      %p273 = scmp.eq.s32.totalorder %s32, 35
      %p274 = por %p272, %p273
      %p275 = scmp.ne.s32.totalorder %s264, %s265
      %p276 = scmp.eq.s32.totalorder %s32, 0
      %p277 = por %p275, %p276
      %p278 = scmp.ne.s32.totalorder %s264, %s265
      %p279 = scmp.eq.s32.totalorder %s33, 35
      %p280 = por %p278, %p279
      %p282 = scmp.ne.s32.totalorder %s265, %s281
      %p283 = scmp.eq.s32.totalorder %s33, 0
      %p284 = por %p282, %p283
      %p285 = scmp.le.s32.totalorder 1, %s27
      %p286 = scmp.lt.s32.totalorder %s27, 37
      %p287 = pnand %p285, %p286
      %p288 = pneg %p287
      // Predicated region
      $region9: #{tpu_custom_call.1} parent=5 // pred_check
        _
      $region10: #{tpu_custom_call.1} parent=5 // pred_check_branch
        %290 = sbr.rel (%p287) target = $region12
      $region11: #{tpu_custom_call.1} parent=5 // pred_region
        %s291 = ssub.s32 %s27, 1
        // Predicated region
        $region13: #{tpu_custom_call.1} parent=11 // pred_check
          %p292 = pneg %p123
        $region14: #{tpu_custom_call.1} parent=11 // pred_check_branch
          %294 = sbr.rel (%p292) target = $region16
        $region15: #{tpu_custom_call.1} parent=11 // pred_region
          %s296 = ssub.s32 16, 16
          %297 = vsyncadd [#allocation10], %s296
          %s299 = sshll.u32 [#allocation11], 4
          %s300 = int_to_ptr.vmem [resolvable:$true] %s299
          %302 = dma.hbm_to_vmem [thread:$0]  %s2, 16, %s300, [#allocation10]
        $region16: #{tpu_custom_call.1} parent=11 // pred_fallthru
          _
        // Predicated region
        $region17: #{tpu_custom_call.1} parent=11 // pred_check
          %p303 = pneg %p144
        $region18: #{tpu_custom_call.1} parent=11 // pred_check_branch
          %305 = sbr.rel (%p303) target = $region20
        $region19: #{tpu_custom_call.1} parent=11 // pred_region
          %s307 = ssub.s32 16, 16
          %308 = vsyncadd [#allocation13], %s307
          %s310 = sshll.u32 [#allocation12], 4
          %s311 = int_to_ptr.vmem [resolvable:$true] %s310
          %313 = dma.hbm_to_vmem [thread:$0]  %s3, 16, %s311, [#allocation13]
        $region20: #{tpu_custom_call.1} parent=11 // pred_fallthru
          _
        // Predicated region
        $region21: #{tpu_custom_call.1} parent=11 // pred_check
          %p314 = pneg %p165
        $region22: #{tpu_custom_call.1} parent=11 // pred_check_branch
          %316 = sbr.rel (%p314) target = $region24
        $region23: #{tpu_custom_call.1} parent=11 // pred_region
          %s318 = ssub.s32 512, 512
          %319 = vsyncadd [#allocation13], %s318
          %s320 = sshll.u32 [#allocation14], 4
          %s321 = int_to_ptr.vmem [resolvable:$true] %s320
          %326 = dma.hbm_to_vmem [thread:$0]  %s4, 512, %s321, [#allocation13], 64, 64, 4
        $region24: #{tpu_custom_call.1} parent=11 // pred_fallthru
          _
        // Predicated region
        $region25: #{tpu_custom_call.1} parent=11 // pred_check
          %p327 = pneg %p186
        $region26: #{tpu_custom_call.1} parent=11 // pred_check_branch
          %329 = sbr.rel (%p327) target = $region28
        $region27: #{tpu_custom_call.1} parent=11 // pred_region
          %s331 = ssub.s32 512, 512
          %332 = vsyncadd [#allocation16], %s331
          %s333 = sshll.u32 [#allocation15], 4
          %s334 = int_to_ptr.vmem [resolvable:$true] %s333
          %339 = dma.hbm_to_vmem [thread:$0]  %s5, 512, %s334, [#allocation16], 64, 64, 4
        $region28: #{tpu_custom_call.1} parent=11 // pred_fallthru
          _
        // Predicated region
        $region29: #{tpu_custom_call.1} parent=11 // pred_check
          %p340 = pneg %p207
        $region30: #{tpu_custom_call.1} parent=11 // pred_check_branch
          %342 = sbr.rel (%p340) target = $region32
        $region31: #{tpu_custom_call.1} parent=11 // pred_region
          %s344 = ssub.s32 512, 512
          %345 = vsyncadd [#allocation16], %s344
          %s346 = sshll.u32 [#allocation17], 4
          %s347 = int_to_ptr.vmem [resolvable:$true] %s346
          %352 = dma.hbm_to_vmem [thread:$0]  %s6, 512, %s347, [#allocation16], 64, 64, 4
        $region32: #{tpu_custom_call.1} parent=11 // pred_fallthru
          _
        // Predicated region
        $region33: #{tpu_custom_call.1} parent=11 // pred_check
          %p353 = pneg %p228
        $region34: #{tpu_custom_call.1} parent=11 // pred_check_branch
          %355 = sbr.rel (%p353) target = $region36
        $region35: #{tpu_custom_call.1} parent=11 // pred_region
          %s357 = ssub.s32 512, 512
          %358 = vsyncadd [#allocation19], %s357
          %s359 = sshll.u32 [#allocation18], 4
          %s360 = int_to_ptr.vmem [resolvable:$true] %s359
          %365 = dma.hbm_to_vmem [thread:$0]  %s7, 512, %s360, [#allocation19], 64, 64, 4
        $region36: #{tpu_custom_call.1} parent=11 // pred_fallthru
          _
        // Predicated region
        $region37: #{tpu_custom_call.1} parent=11 // pred_check
          %p366 = pneg %p249
        $region38: #{tpu_custom_call.1} parent=11 // pred_check_branch
          %368 = sbr.rel (%p366) target = $region40
        $region39: #{tpu_custom_call.1} parent=11 // pred_region
          %s370 = ssub.s32 16, 16
          %371 = vsyncadd [#allocation19], %s370
          %s373 = sshll.u32 [#allocation20], 4
          %s374 = int_to_ptr.vmem [resolvable:$true] %s373
          %376 = dma.hbm_to_vmem [thread:$0]  %s8, 16, %s374, [#allocation19]
        $region40: #{tpu_custom_call.1} parent=11 // pred_fallthru
          _
      $region12: #{tpu_custom_call.1} parent=5 // pred_fallthru
        _
      %p377 = scmp.lt.s32.totalorder %s27, 36
      // Predicated region
      $region41: #{tpu_custom_call.1} parent=5 // pred_check
        %p378 = pneg %p377
      $region42: #{tpu_custom_call.1} parent=5 // pred_check_branch
        %380 = sbr.rel (%p378) target = $region44
      $region43: #{tpu_custom_call.1} parent=5 // pred_region
        // Predicated region
        $region45: #{tpu_custom_call.1} parent=43 // pred_check
          %p381 = pneg %p68
        $region46: #{tpu_custom_call.1} parent=43 // pred_check_branch
          %383 = sbr.rel (%p381) target = $region48
        $region47: #{tpu_custom_call.1} parent=43 // pred_region
          %s384 = sand.u32 %s58, 1
          %s385 = scalar_lea.sflag [#allocation7], %s384
          %s386 = sand.u32 %s58, 1
          %s387 = smul.addr %s386, 8
          %s388 = scalar_lea.vmem [#allocation6], %s387
          %s390 = ssub.s32 128, 128
          %391 = vsyncadd %s385, %s390
          %s392 = smul.addr %s34, 3
          %s393 = sadd.s32 %s35, %s392
          %s394 = smul.addr %s393, 128
          %s395 = scalar_lea.hbm %s0, %s394
          %s397 = sshll.u32 %s388, 4
          %s398 = int_to_ptr.vmem [resolvable:$true] %s397
          %400 = dma.hbm_to_vmem [thread:$0]  %s395, 128, %s398, %s385
        $region48: #{tpu_custom_call.1} parent=43 // pred_fallthru
          _
        // Predicated region
        $region49: #{tpu_custom_call.1} parent=43 // pred_check
          %p401 = pneg %p96
        $region50: #{tpu_custom_call.1} parent=43 // pred_check_branch
          %403 = sbr.rel (%p401) target = $region52
        $region51: #{tpu_custom_call.1} parent=43 // pred_region
          %s404 = sand.u32 %s27, 1
          %s405 = scalar_lea.sflag [#allocation10], %s404
          %s406 = sand.u32 %s86, 1
          %s407 = smul.addr %s406, 8
          %s408 = scalar_lea.vmem [#allocation9], %s407
          %s410 = ssub.s32 128, 128
          %411 = vsyncadd %s405, %s410
          %s412 = smul.addr %s34, 3
          %s413 = sadd.s32 %s36, %s412
          %s414 = smul.addr %s413, 128
          %s415 = scalar_lea.hbm %s1, %s414
          %s417 = sshll.u32 %s408, 4
          %s418 = int_to_ptr.vmem [resolvable:$true] %s417
          %420 = dma.hbm_to_vmem [thread:$0]  %s415, 128, %s418, %s405
        $region52: #{tpu_custom_call.1} parent=43 // pred_fallthru
          _
      $region44: #{tpu_custom_call.1} parent=5 // pred_fallthru
        _
      %p421 = scmp.le.s32.totalorder 1, %s27
      %p422 = scmp.lt.s32.totalorder %s27, 37
      %p423 = pnand %p421, %p422
      %p424 = pneg %p423
      // Predicated region
      $region53: #{tpu_custom_call.1} parent=5 // pred_check
        _
      $region54: #{tpu_custom_call.1} parent=5 // pred_check_branch
        %426 = sbr.rel (%p423) target = $region56
      $region55: #{tpu_custom_call.1} parent=5 // pred_region
        %s427 = ssub.s32 %s27, 1
        %s428 = sand.u32 %s61, 1
        %s429 = scalar_lea.sflag [#allocation7], %s428
        %s430 = sand.u32 %s61, 1
        %s431 = smul.addr %s430, 8
        %s432 = scalar_lea.vmem [#allocation6], %s431
        // Predicated region
        $region57: #{tpu_custom_call.1} parent=55 // pred_check
          %p433 = pneg %p74
        $region58: #{tpu_custom_call.1} parent=55 // pred_check_branch
          %435 = sbr.rel (%p433) target = $region60
        $region59: #{tpu_custom_call.1} parent=55 // pred_region
          %436 = dma.done %s429, 128
        $region60: #{tpu_custom_call.1} parent=55 // pred_fallthru
          _
        %s437 = sand.u32 %s32, 1
        %s438 = scalar_lea.sflag [#allocation10], %s437
        %s439 = sand.u32 %s89, 1
        %s440 = smul.addr %s439, 8
        %s441 = scalar_lea.vmem [#allocation9], %s440
        // Predicated region
        $region61: #{tpu_custom_call.1} parent=55 // pred_check
          %p442 = pneg %p102
        $region62: #{tpu_custom_call.1} parent=55 // pred_check_branch
          %444 = sbr.rel (%p442) target = $region64
        $region63: #{tpu_custom_call.1} parent=55 // pred_region
          %445 = dma.done %s438, 128
        $region64: #{tpu_custom_call.1} parent=55 // pred_fallthru
          _
        // Predicated region
        $region65: #{tpu_custom_call.1} parent=55 // pred_check
          %p446 = pneg %p123
        $region66: #{tpu_custom_call.1} parent=55 // pred_check_branch
          %448 = sbr.rel (%p446) target = $region68
        $region67: #{tpu_custom_call.1} parent=55 // pred_region
          %449 = dma.done [#allocation10], 16
        $region68: #{tpu_custom_call.1} parent=55 // pred_fallthru
          _
        // Predicated region
        $region69: #{tpu_custom_call.1} parent=55 // pred_check
          %p450 = pneg %p144
        $region70: #{tpu_custom_call.1} parent=55 // pred_check_branch
          %452 = sbr.rel (%p450) target = $region72
        $region71: #{tpu_custom_call.1} parent=55 // pred_region
          %453 = dma.done [#allocation13], 16
        $region72: #{tpu_custom_call.1} parent=55 // pred_fallthru
          _
        // Predicated region
        $region73: #{tpu_custom_call.1} parent=55 // pred_check
          %p454 = pneg %p165
        $region74: #{tpu_custom_call.1} parent=55 // pred_check_branch
          %456 = sbr.rel (%p454) target = $region76
        $region75: #{tpu_custom_call.1} parent=55 // pred_region
          %457 = dma.done [#allocation13], 512
        $region76: #{tpu_custom_call.1} parent=55 // pred_fallthru
          _
        // Predicated region
        $region77: #{tpu_custom_call.1} parent=55 // pred_check
          %p458 = pneg %p186
        $region78: #{tpu_custom_call.1} parent=55 // pred_check_branch
          %460 = sbr.rel (%p458) target = $region80
        $region79: #{tpu_custom_call.1} parent=55 // pred_region
          %461 = dma.done [#allocation16], 512
        $region80: #{tpu_custom_call.1} parent=55 // pred_fallthru
          _
        // Predicated region
        $region81: #{tpu_custom_call.1} parent=55 // pred_check
          %p462 = pneg %p207
        $region82: #{tpu_custom_call.1} parent=55 // pred_check_branch
          %464 = sbr.rel (%p462) target = $region84
        $region83: #{tpu_custom_call.1} parent=55 // pred_region
          %465 = dma.done [#allocation16], 512
        $region84: #{tpu_custom_call.1} parent=55 // pred_fallthru
          _
        // Predicated region
        $region85: #{tpu_custom_call.1} parent=55 // pred_check
          %p466 = pneg %p228
        $region86: #{tpu_custom_call.1} parent=55 // pred_check_branch
          %468 = sbr.rel (%p466) target = $region88
        $region87: #{tpu_custom_call.1} parent=55 // pred_region
          %469 = dma.done [#allocation19], 512
        $region88: #{tpu_custom_call.1} parent=55 // pred_fallthru
          _
        // Predicated region
        $region89: #{tpu_custom_call.1} parent=55 // pred_check
          %p470 = pneg %p249
        $region90: #{tpu_custom_call.1} parent=55 // pred_check_branch
          %472 = sbr.rel (%p470) target = $region92
        $region91: #{tpu_custom_call.1} parent=55 // pred_region
          %473 = dma.done [#allocation19], 16
        $region92: #{tpu_custom_call.1} parent=55 // pred_fallthru
          _
        %s474 = sand.u32 %s61, 1
        %s475 = scalar_lea.sflag [#allocation7], %s474
        %s476 = sand.u32 %s61, 1
        %s477 = smul.addr %s476, 8
        %s478 = scalar_lea.vmem [#allocation6], %s477
        %p479 = pneg %p74
        %p480 = pneg %p71
        %s481 = sand.u32 %s32, 1
        %s482 = scalar_lea.sflag [#allocation10], %s481
        %s483 = sand.u32 %s89, 1
        %s484 = smul.addr %s483, 8
        %s485 = scalar_lea.vmem [#allocation9], %s484
        %p486 = pneg %p102
        %p487 = pneg %p99
        %p488 = pneg %p123
        %p489 = pneg %p120
        %p490 = pneg %p144
        %p491 = pneg %p141
        %p492 = pneg %p165
        %p493 = pneg %p162
        %p494 = pneg %p186
        %p495 = pneg %p183
        %p496 = pneg %p207
        %p497 = pneg %p204
        %p498 = pneg %p228
        %p499 = pneg %p225
        %p500 = pneg %p249
        %p501 = pneg %p246
        %p502 = pneg %p277
        %p503 = pneg %p274
        %s504 = sand.u32 %s264, 1
        %s505 = scalar_lea.sflag [#allocation8], %s504
        %s506 = sand.u32 %s264, 1
        %s507 = smul.addr %s506, 8
        %s508 = scalar_lea.vmem [#allocation21], %s507
        %p510 = scmp.eq.s32.totalorder %s39, 0
        // Predicated region
        $region93: #{tpu_custom_call.1} parent=55 // pred_check
          %p511 = pneg %p510
        $region94: #{tpu_custom_call.1} parent=55 // pred_check_branch
          %513 = sbr.rel (%p511) target = $region96
        $region95: #{tpu_custom_call.1} parent=55 // pred_region
          %v514 = vld [vmem:[%s432] sm:$0xff]
          %v515 = vld [vmem:[#allocation11] sm:$0x1]
          %v516 = vld [vmem:[#allocation12] sm:$0x1]
          %vm517 = vcmask 523264
          %v518 = vsel %vm517, %v514, 0.0
          %519 = vadd.xlane.f32.xlu0 %v518
          %v520 = vpop.xlane.xlu0 %519
          %v521 = vrcp.pop 64.0
          %v522 = vmul.f32 %v520, %v521
          %v523 = vsub.f32 %v514, %v522
          %v524 = vmul.f32 %v523, %v523
          %v525 = vsel %vm517, %v524, 0.0
          %526 = vadd.xlane.f32.xlu0 %v525
          %v527 = vpop.xlane.xlu0 %526
          %v528 = vmul.f32 %v527, %v521
          %v529 = vadd.f32 %v528, 1e-05
          %v530 = vrsqrt.pop %v529
          %v531 = vmul.f32 %v523, %v530
          %v533 = vlaneseq
          %v534 = vshrl.u32 %v533, 7
          %v535 = vsub.s32 0, %v534
          %v536 = vrot.slane %v515, %v535
          %v538 = vmul.f32 %v531, %v536
          %v540 = vlaneseq
          %v541 = vshrl.u32 %v540, 7
          %v542 = vsub.s32 0, %v541
          %v543 = vrot.slane %v516, %v542
          %v545 = vadd.f32 %v538, %v543
          %v546 = vpack.c.bf16 %v545, %v545
          %v547 = vld [vmem:[#allocation14] sm:$0xf]
          %v548 = vld [vmem:[#allocation14 + $0x4] sm:$0xf]
          %v549 = vld [vmem:[#allocation14 + $0x8] sm:$0xf]
          %v550 = vld [vmem:[#allocation14 + $0xc] sm:$0xf]
          %v551 = vld [vmem:[#allocation14 + $0x10] sm:$0xf]
          %v552 = vld [vmem:[#allocation14 + $0x14] sm:$0xf]
          %v553 = vld [vmem:[#allocation14 + $0x18] sm:$0xf]
          %v554 = vld [vmem:[#allocation14 + $0x1c] sm:$0xf]
          %v563 = vunpack.c.l.b16 %v547
          %v564 = vunpack.c.l.b16 %v548
          %v565 = vunpack.c.l.b16 %v549
          %v566 = vunpack.c.l.b16 %v550
          %v567 = vunpack.c.l.b16 %v551
          %v568 = vunpack.c.l.b16 %v552
          %v569 = vunpack.c.l.b16 %v553
          %v570 = vunpack.c.l.b16 %v554
          %v571 = vpack.c.b16 %v564, %v563
          %v572 = vpack.c.b16 %v566, %v565
          %v573 = vpack.c.b16 %v568, %v567
          %v574 = vpack.c.b16 %v570, %v569
          %v580 = vsel %vm517, %v546, 0
          %582 = vmatprep.subr.bf16.mxu0 0
          %583 = vmatpush1.bf16.msra.mxu0 %v571
          %584 = vmatprep.subr.bf16.mxu0 0
          %585 = vmatpush1.bf16.msra.mxu0 %v572
          %586 = vmatprep.subr.bf16.mxu0 0
          %587 = vmatpush1.bf16.msra.mxu0 %v573
          %588 = vmatprep.subr.bf16.mxu0 0
          %589 = vmatpush1.bf16.msra.mxu0 %v574
          %590 = vmatprep.subr.bf16.mxu0 0
          %591 = vmatpush1.bf16.msra.mxu0 0
          %592 = vmatprep.subr.bf16.mxu0 0
          %593 = vmatpush1.bf16.msra.mxu0 0
          %594 = vmatprep.subr.bf16.mxu0 0
          %595 = vmatpush1.bf16.msra.mxu0 0
          %596 = vmatprep.subr.bf16.mxu0 0
          %597 = vmatpush1.bf16.msra.mxu0 0
          %598 = vmatprep.subr.bf16.mxu0 0
          %599 = vmatpush1.bf16.msra.mxu0 0
          %600 = vmatprep.subr.bf16.mxu0 0
          %601 = vmatpush1.bf16.msra.mxu0 0
          %602 = vmatprep.subr.bf16.mxu0 0
          %603 = vmatpush1.bf16.msra.mxu0 0
          %604 = vmatprep.subr.bf16.mxu0 0
          %605 = vmatpush1.bf16.msra.mxu0 0
          %606 = vmatprep.subr.bf16.mxu0 0
          %607 = vmatpush1.bf16.msra.mxu0 0
          %608 = vmatprep.subr.bf16.mxu0 0
          %609 = vmatpush1.bf16.msra.mxu0 0
          %610 = vmatprep.subr.bf16.mxu0 0
          %611 = vmatpush1.bf16.msra.mxu0 0
          %612 = vmatprep.subr.bf16.mxu0 0
          %613 = vmatpush1.bf16.msra.mxu0 0
          %614 = vmatprep.mubr.bf16.mxu0 0
          %615 = vmatmul.mubr.bf16.gmra.mrb[0].mxu0 %v580
          %v616 = vpop.f32.mrb[0].mxu0
          %v617 = vadd.f32 0.0, %v616
          %v618 = vpop.f32.mrb[0].mxu0
          %v619 = vpop.f32.mrb[0].mxu0
          %v620 = vpop.f32.mrb[0].mxu0
          %621 = vdwg.mxu0
          %623 = vrot.lane.b32.xlu0 %v617, 96
          %v624 = vpop.permute.xlu0 %623
          %v626 = vpack.c.bf16 %v617, %v617
          %v627 = vpack.c.bf16 %v624, %v624
          %vm628 = vcmask 257024
          %629 = vst.msk [vmem:[#allocation2] sm:$0xf] %vm628, %v626
          %630 = vst.msk [vmem:[#allocation2 + $0x4] sm:$0xf] %vm628, %v627
          %vm631 = vcmask 7168
          %632 = vst.msk [vmem:[#allocation3] sm:$0xff] %vm631, -inf
          %633 = vst.msk [vmem:[#allocation3 + $0x8] sm:$0xff] %vm631, -inf
          %634 = vst.msk [vmem:[#allocation4] sm:$0xff] %vm631, 0.0
          %635 = vst.msk [vmem:[#allocation4 + $0x8] sm:$0xff] %vm631, 0.0
          %vm636 = vcmask 261120
          %637 = vst.msk [vmem:[#allocation5] sm:$0xff] %vm636, 0.0
          %638 = vst.msk [vmem:[#allocation5 + $0x8] sm:$0xff] %vm636, 0.0
        $region96: #{tpu_custom_call.1} parent=55 // pred_fallthru
          _
        %v639 = vld [vmem:[%s441] sm:$0xff]
        %v640 = vld [vmem:[#allocation11] sm:$0x1]
        %v641 = vld [vmem:[#allocation12] sm:$0x1]
        %vm642 = vcmask 523264
        %v643 = vsel %vm642, %v639, 0.0
        %644 = vadd.xlane.f32.xlu0 %v643
        %v645 = vpop.xlane.xlu0 %644
        %v646 = vrcp.pop 64.0
        %v647 = vmul.f32 %v645, %v646
        %v648 = vsub.f32 %v639, %v647
        %v649 = vmul.f32 %v648, %v648
        %v650 = vsel %vm642, %v649, 0.0
        %651 = vadd.xlane.f32.xlu0 %v650
        %v652 = vpop.xlane.xlu0 %651
        %v653 = vmul.f32 %v652, %v646
        %v654 = vadd.f32 %v653, 1e-05
        %v655 = vrsqrt.pop %v654
        %v656 = vmul.f32 %v648, %v655
        %v658 = vlaneseq
        %v659 = vshrl.u32 %v658, 7
        %v660 = vsub.s32 0, %v659
        %v661 = vrot.slane %v640, %v660
        %v663 = vmul.f32 %v656, %v661
        %v665 = vlaneseq
        %v666 = vshrl.u32 %v665, 7
        %v667 = vsub.s32 0, %v666
        %v668 = vrot.slane %v641, %v667
        %v670 = vadd.f32 %v663, %v668
        %v671 = vpack.c.bf16 %v670, %v670
        %v672 = vld [vmem:[#allocation15] sm:$0xf]
        %v673 = vld [vmem:[#allocation15 + $0x4] sm:$0xf]
        %v674 = vld [vmem:[#allocation15 + $0x8] sm:$0xf]
        %v675 = vld [vmem:[#allocation15 + $0xc] sm:$0xf]
        %v676 = vld [vmem:[#allocation15 + $0x10] sm:$0xf]
        %v677 = vld [vmem:[#allocation15 + $0x14] sm:$0xf]
        %v678 = vld [vmem:[#allocation15 + $0x18] sm:$0xf]
        %v679 = vld [vmem:[#allocation15 + $0x1c] sm:$0xf]
        %v688 = vunpack.c.l.b16 %v672
        %v689 = vunpack.c.l.b16 %v673
        %v690 = vunpack.c.l.b16 %v674
        %v691 = vunpack.c.l.b16 %v675
        %v692 = vunpack.c.l.b16 %v676
        %v693 = vunpack.c.l.b16 %v677
        %v694 = vunpack.c.l.b16 %v678
        %v695 = vunpack.c.l.b16 %v679
        %v696 = vpack.c.b16 %v689, %v688
        %v697 = vpack.c.b16 %v691, %v690
        %v698 = vpack.c.b16 %v693, %v692
        %v699 = vpack.c.b16 %v695, %v694
        %v705 = vsel %vm642, %v671, 0
        %707 = vmatprep.subr.bf16.mxu0 0
        %708 = vmatpush1.bf16.msra.mxu0 %v696
        %709 = vmatprep.subr.bf16.mxu0 0
        %710 = vmatpush1.bf16.msra.mxu0 %v697
        %711 = vmatprep.subr.bf16.mxu0 0
        %712 = vmatpush1.bf16.msra.mxu0 %v698
        %713 = vmatprep.subr.bf16.mxu0 0
        %714 = vmatpush1.bf16.msra.mxu0 %v699
        %715 = vmatprep.subr.bf16.mxu0 0
        %716 = vmatpush1.bf16.msra.mxu0 0
        %717 = vmatprep.subr.bf16.mxu0 0
        %718 = vmatpush1.bf16.msra.mxu0 0
        %719 = vmatprep.subr.bf16.mxu0 0
        %720 = vmatpush1.bf16.msra.mxu0 0
        %721 = vmatprep.subr.bf16.mxu0 0
        %722 = vmatpush1.bf16.msra.mxu0 0
        %723 = vmatprep.subr.bf16.mxu0 0
        %724 = vmatpush1.bf16.msra.mxu0 0
        %725 = vmatprep.subr.bf16.mxu0 0
        %726 = vmatpush1.bf16.msra.mxu0 0
        %727 = vmatprep.subr.bf16.mxu0 0
        %728 = vmatpush1.bf16.msra.mxu0 0
        %729 = vmatprep.subr.bf16.mxu0 0
        %730 = vmatpush1.bf16.msra.mxu0 0
        %731 = vmatprep.subr.bf16.mxu0 0
        %732 = vmatpush1.bf16.msra.mxu0 0
        %733 = vmatprep.subr.bf16.mxu0 0
        %734 = vmatpush1.bf16.msra.mxu0 0
        %735 = vmatprep.subr.bf16.mxu0 0
        %736 = vmatpush1.bf16.msra.mxu0 0
        %737 = vmatprep.subr.bf16.mxu0 0
        %738 = vmatpush1.bf16.msra.mxu0 0
        %739 = vmatprep.mubr.bf16.mxu0 0
        %740 = vmatmul.mubr.bf16.gmra.mrb[0].mxu0 %v705
        %v741 = vpop.f32.mrb[0].mxu0
        %v742 = vadd.f32 0.0, %v741
        %v743 = vpop.f32.mrb[0].mxu0
        %v744 = vpop.f32.mrb[0].mxu0
        %v745 = vpop.f32.mrb[0].mxu0
        %746 = vdwg.mxu0
        %v747 = vpack.c.bf16 %v742, %v742
        %v748 = vld [vmem:[#allocation17] sm:$0xf]
        %v749 = vld [vmem:[#allocation17 + $0x4] sm:$0xf]
        %v750 = vld [vmem:[#allocation17 + $0x8] sm:$0xf]
        %v751 = vld [vmem:[#allocation17 + $0xc] sm:$0xf]
        %v752 = vld [vmem:[#allocation17 + $0x10] sm:$0xf]
        %v753 = vld [vmem:[#allocation17 + $0x14] sm:$0xf]
        %v754 = vld [vmem:[#allocation17 + $0x18] sm:$0xf]
        %v755 = vld [vmem:[#allocation17 + $0x1c] sm:$0xf]
        %v764 = vunpack.c.l.b16 %v748
        %v765 = vunpack.c.l.b16 %v749
        %v766 = vunpack.c.l.b16 %v750
        %v767 = vunpack.c.l.b16 %v751
        %v768 = vunpack.c.l.b16 %v752
        %v769 = vunpack.c.l.b16 %v753
        %v770 = vunpack.c.l.b16 %v754
        %v771 = vunpack.c.l.b16 %v755
        %v772 = vpack.c.b16 %v765, %v764
        %v773 = vpack.c.b16 %v767, %v766
        %v774 = vpack.c.b16 %v769, %v768
        %v775 = vpack.c.b16 %v771, %v770
        %780 = vmatprep.subr.bf16.mxu0 0
        %781 = vmatpush1.bf16.msra.mxu0 %v772
        %782 = vmatprep.subr.bf16.mxu0 0
        %783 = vmatpush1.bf16.msra.mxu0 %v773
        %784 = vmatprep.subr.bf16.mxu0 0
        %785 = vmatpush1.bf16.msra.mxu0 %v774
        %786 = vmatprep.subr.bf16.mxu0 0
        %787 = vmatpush1.bf16.msra.mxu0 %v775
        %788 = vmatprep.subr.bf16.mxu0 0
        %789 = vmatpush1.bf16.msra.mxu0 0
        %790 = vmatprep.subr.bf16.mxu0 0
        %791 = vmatpush1.bf16.msra.mxu0 0
        %792 = vmatprep.subr.bf16.mxu0 0
        %793 = vmatpush1.bf16.msra.mxu0 0
        %794 = vmatprep.subr.bf16.mxu0 0
        %795 = vmatpush1.bf16.msra.mxu0 0
        %796 = vmatprep.subr.bf16.mxu0 0
        %797 = vmatpush1.bf16.msra.mxu0 0
        %798 = vmatprep.subr.bf16.mxu0 0
        %799 = vmatpush1.bf16.msra.mxu0 0
        %800 = vmatprep.subr.bf16.mxu0 0
        %801 = vmatpush1.bf16.msra.mxu0 0
        %802 = vmatprep.subr.bf16.mxu0 0
        %803 = vmatpush1.bf16.msra.mxu0 0
        %804 = vmatprep.subr.bf16.mxu0 0
        %805 = vmatpush1.bf16.msra.mxu0 0
        %806 = vmatprep.subr.bf16.mxu0 0
        %807 = vmatpush1.bf16.msra.mxu0 0
        %808 = vmatprep.subr.bf16.mxu0 0
        %809 = vmatpush1.bf16.msra.mxu0 0
        %810 = vmatprep.subr.bf16.mxu0 0
        %811 = vmatpush1.bf16.msra.mxu0 0
        %812 = vmatprep.mubr.bf16.mxu0 0
        %813 = vmatmul.mubr.bf16.gmra.mrb[0].mxu0 %v705
        %v814 = vpop.f32.mrb[0].mxu0
        %v815 = vadd.f32 0.0, %v814
        %v816 = vpop.f32.mrb[0].mxu0
        %v817 = vpop.f32.mrb[0].mxu0
        %v818 = vpop.f32.mrb[0].mxu0
        %819 = vdwg.mxu0
        %v820 = vpack.c.bf16 %v815, %v815
        %822 = vrot.lane.b32.xlu0 %v747, 96
        %v823 = vpop.permute.xlu0 %822
        %825 = vrot.lane.b32.xlu0 %v820, 96
        %v826 = vpop.permute.xlu0 %825
        %v827 = vld [vmem:[#allocation2] sm:$0xf]
        %v828 = vld [vmem:[#allocation2 + $0x4] sm:$0xf]
        %vm829 = vcmask 261120
        %v831 = vsel %vm829, %v827, 0
        %v834 = vsel %vm829, %v747, 0
        %836 = vmatprep.subr.bf16.mxu0 0
        %837 = vmatpush1.bf16.xpose.msra.mxu0 %v834
        %838 = vmatprep.subr.bf16.mxu0 0
        %839 = vmatpush1.bf16.xpose.msra.mxu0 0
        %840 = vmatprep.subr.bf16.mxu0 0
        %841 = vmatpush1.bf16.xpose.msra.mxu0 0
        %842 = vmatprep.subr.bf16.mxu0 0
        %843 = vmatpush1.bf16.xpose.msra.mxu0 0
        %844 = vmatprep.subr.bf16.mxu0 0
        %845 = vmatpush1.bf16.xpose.msra.mxu0 0
        %846 = vmatprep.subr.bf16.mxu0 0
        %847 = vmatpush1.bf16.xpose.msra.mxu0 0
        %848 = vmatprep.subr.bf16.mxu0 0
        %849 = vmatpush1.bf16.xpose.msra.mxu0 0
        %850 = vmatprep.subr.bf16.mxu0 0
        %851 = vmatpush1.bf16.xpose.msra.mxu0 0
        %852 = vmatprep.subr.bf16.mxu0 0
        %853 = vmatpush1.bf16.xpose.msra.mxu0 0
        %854 = vmatprep.subr.bf16.mxu0 0
        %855 = vmatpush1.bf16.xpose.msra.mxu0 0
        %856 = vmatprep.subr.bf16.mxu0 0
        %857 = vmatpush1.bf16.xpose.msra.mxu0 0
        %858 = vmatprep.subr.bf16.mxu0 0
        %859 = vmatpush1.bf16.xpose.msra.mxu0 0
        %860 = vmatprep.subr.bf16.mxu0 0
        %861 = vmatpush1.bf16.xpose.msra.mxu0 0
        %862 = vmatprep.subr.bf16.mxu0 0
        %863 = vmatpush1.bf16.xpose.msra.mxu0 0
        %864 = vmatprep.subr.bf16.mxu0 0
        %865 = vmatpush1.bf16.xpose.msra.mxu0 0
        %866 = vmatprep.subr.bf16.mxu0 0
        %867 = vmatpush1.bf16.xpose.msra.mxu0 0
        %868 = vmatprep.mubr.bf16.mxu0 0
        %869 = vmatmul.mubr.bf16.gmra.mrb[0].mxu0 %v831
        %v870 = vpop.f32.mrb[0].mxu0
        %v871 = vadd.f32 0.0, %v870
        %v872 = vpop.f32.mrb[0].mxu0
        %v873 = vpop.f32.mrb[0].mxu0
        %v874 = vpop.f32.mrb[0].mxu0
        %875 = vdwg.mxu0
        %v877 = vsel %vm829, %v828, 0
        %v880 = vsel %vm829, %v823, 0
        %882 = vmatprep.subr.bf16.mxu0 0
        %883 = vmatpush1.bf16.xpose.msra.mxu0 %v880
        %884 = vmatprep.subr.bf16.mxu0 0
        %885 = vmatpush1.bf16.xpose.msra.mxu0 0
        %886 = vmatprep.subr.bf16.mxu0 0
        %887 = vmatpush1.bf16.xpose.msra.mxu0 0
        %888 = vmatprep.subr.bf16.mxu0 0
        %889 = vmatpush1.bf16.xpose.msra.mxu0 0
        %890 = vmatprep.subr.bf16.mxu0 0
        %891 = vmatpush1.bf16.xpose.msra.mxu0 0
        %892 = vmatprep.subr.bf16.mxu0 0
        %893 = vmatpush1.bf16.xpose.msra.mxu0 0
        %894 = vmatprep.subr.bf16.mxu0 0
        %895 = vmatpush1.bf16.xpose.msra.mxu0 0
        %896 = vmatprep.subr.bf16.mxu0 0
        %897 = vmatpush1.bf16.xpose.msra.mxu0 0
        %898 = vmatprep.subr.bf16.mxu0 0
        %899 = vmatpush1.bf16.xpose.msra.mxu0 0
        %900 = vmatprep.subr.bf16.mxu0 0
        %901 = vmatpush1.bf16.xpose.msra.mxu0 0
        %902 = vmatprep.subr.bf16.mxu0 0
        %903 = vmatpush1.bf16.xpose.msra.mxu0 0
        %904 = vmatprep.subr.bf16.mxu0 0
        %905 = vmatpush1.bf16.xpose.msra.mxu0 0
        %906 = vmatprep.subr.bf16.mxu0 0
        %907 = vmatpush1.bf16.xpose.msra.mxu0 0
        %908 = vmatprep.subr.bf16.mxu0 0
        %909 = vmatpush1.bf16.xpose.msra.mxu0 0
        %910 = vmatprep.subr.bf16.mxu0 0
        %911 = vmatpush1.bf16.xpose.msra.mxu0 0
        %912 = vmatprep.subr.bf16.mxu0 0
        %913 = vmatpush1.bf16.xpose.msra.mxu0 0
        %914 = vmatprep.mubr.bf16.mxu0 0
        %915 = vmatmul.mubr.bf16.gmra.mrb[0].mxu0 %v877
        %v916 = vpop.f32.mrb[0].mxu0
        %v917 = vadd.f32 0.0, %v916
        %v918 = vpop.f32.mrb[0].mxu0
        %v919 = vpop.f32.mrb[0].mxu0
        %v920 = vpop.f32.mrb[0].mxu0
        %921 = vdwg.mxu0
        %v922 = vld [vmem:[#allocation3] sm:$0xff]
        %v923 = vld [vmem:[#allocation3 + $0x8] sm:$0xff]
        %vm924 = vcmask 64512
        %v925 = vsel %vm924, %v871, -inf
        %926 = vmax.xlane.f32.xlu0 %v925
        %v927 = vpop.xlane.xlu0 %926
        %v928 = vsel %vm924, %v917, -inf
        %929 = vmax.xlane.f32.xlu0 %v928
        %v930 = vpop.xlane.xlu0 %929
        %v931 = vmax.f32 %v922, %v927
        %v932 = vmax.f32 %v923, %v930
        %v933 = vsub.f32 %v922, %v931
        %v934 = vsub.f32 %v923, %v932
        %v935 = vmul.f32 %v933, 1.442695
        %v936 = vpow.pop %v935
        %v937 = vmul.f32 %v934, 1.442695
        %v938 = vpow.pop %v937
        %940 = vset.pattern.permute.xlu0 0
        %941 = vperm.xlu0 %940, %v931
        %v942 = vpop.permute.xlu0 %941
        %945 = vset.pattern.permute.xlu0 0
        %946 = vperm.xlu0 %945, %v932
        %v947 = vpop.permute.xlu0 %946
        %v949 = vsub.f32 %v871, %v942
        %v950 = vsub.f32 %v917, %v947
        %v951 = vmul.f32 %v949, 1.442695
        %v952 = vpow.pop %v951
        %v953 = vmul.f32 %v950, 1.442695
        %v954 = vpow.pop %v953
        %v955 = vld [vmem:[#allocation4] sm:$0xff]
        %v956 = vld [vmem:[#allocation4 + $0x8] sm:$0xff]
        %v957 = vmul.f32 %v936, %v955
        %v958 = vmul.f32 %v938, %v956
        %v959 = vsel %vm924, %v952, 0.0
        %960 = vadd.xlane.f32.xlu0 %v959
        %v961 = vpop.xlane.xlu0 %960
        %v962 = vsel %vm924, %v954, 0.0
        %963 = vadd.xlane.f32.xlu0 %v962
        %v964 = vpop.xlane.xlu0 %963
        %v965 = vadd.f32 %v957, %v961
        %v966 = vadd.f32 %v958, %v964
        %vm967 = vcmask 7168
        %968 = vst.msk [vmem:[#allocation4] sm:$0xff] %vm967, %v965
        %969 = vst.msk [vmem:[#allocation4 + $0x8] sm:$0xff] %vm967, %v966
        %v970 = vld [vmem:[#allocation5] sm:$0xff]
        %v971 = vld [vmem:[#allocation5 + $0x8] sm:$0xff]
        %973 = vset.pattern.permute.xlu0 0
        %974 = vperm.xlu0 %973, %v936
        %v975 = vpop.permute.xlu0 %974
        %978 = vset.pattern.permute.xlu0 0
        %979 = vperm.xlu0 %978, %v938
        %v980 = vpop.permute.xlu0 %979
        %v982 = vmul.f32 %v975, %v970
        %v983 = vmul.f32 %v980, %v971
        %v984 = vpack.c.bf16 %v952, %v952
        %v985 = vpack.c.bf16 %v954, %v954
        %v987 = vsel %vm924, %v984, 0
        %vm989 = vcmask 1043456
        %v991 = vsel %vm989, %v820, 0
        %993 = vmatprep.subr.bf16.mxu0 0
        %994 = vmatpush1.bf16.msra.mxu0 %v991
        %995 = vmatprep.subr.bf16.mxu0 0
        %996 = vmatpush1.bf16.msra.mxu0 0
        %997 = vmatprep.subr.bf16.mxu0 0
        %998 = vmatpush1.bf16.msra.mxu0 0
        %999 = vmatprep.subr.bf16.mxu0 0
        %1000 = vmatpush1.bf16.msra.mxu0 0
        %1001 = vmatprep.subr.bf16.mxu0 0
        %1002 = vmatpush1.bf16.msra.mxu0 0
        %1003 = vmatprep.subr.bf16.mxu0 0
        %1004 = vmatpush1.bf16.msra.mxu0 0
        %1005 = vmatprep.subr.bf16.mxu0 0
        %1006 = vmatpush1.bf16.msra.mxu0 0
        %1007 = vmatprep.subr.bf16.mxu0 0
        %1008 = vmatpush1.bf16.msra.mxu0 0
        %1009 = vmatprep.subr.bf16.mxu0 0
        %1010 = vmatpush1.bf16.msra.mxu0 0
        %1011 = vmatprep.subr.bf16.mxu0 0
        %1012 = vmatpush1.bf16.msra.mxu0 0
        %1013 = vmatprep.subr.bf16.mxu0 0
        %1014 = vmatpush1.bf16.msra.mxu0 0
        %1015 = vmatprep.subr.bf16.mxu0 0
        %1016 = vmatpush1.bf16.msra.mxu0 0
        %1017 = vmatprep.subr.bf16.mxu0 0
        %1018 = vmatpush1.bf16.msra.mxu0 0
        %1019 = vmatprep.subr.bf16.mxu0 0
        %1020 = vmatpush1.bf16.msra.mxu0 0
        %1021 = vmatprep.subr.bf16.mxu0 0
        %1022 = vmatpush1.bf16.msra.mxu0 0
        %1023 = vmatprep.subr.bf16.mxu0 0
        %1024 = vmatpush1.bf16.msra.mxu0 0
        %1025 = vmatprep.mubr.bf16.mxu0 0
        %1026 = vmatmul.mubr.bf16.gmra.mrb[0].mxu0 %v987
        %v1027 = vpop.f32.mrb[0].mxu0
        %v1028 = vadd.f32 0.0, %v1027
        %v1029 = vpop.f32.mrb[0].mxu0
        %v1030 = vpop.f32.mrb[0].mxu0
        %v1031 = vpop.f32.mrb[0].mxu0
        %1032 = vdwg.mxu0
        %v1034 = vsel %vm924, %v985, 0
        %v1037 = vsel %vm989, %v826, 0
        %1039 = vmatprep.subr.bf16.mxu0 0
        %1040 = vmatpush1.bf16.msra.mxu0 %v1037
        %1041 = vmatprep.subr.bf16.mxu0 0
        %1042 = vmatpush1.bf16.msra.mxu0 0
        %1043 = vmatprep.subr.bf16.mxu0 0
        %1044 = vmatpush1.bf16.msra.mxu0 0
        %1045 = vmatprep.subr.bf16.mxu0 0
        %1046 = vmatpush1.bf16.msra.mxu0 0
        %1047 = vmatprep.subr.bf16.mxu0 0
        %1048 = vmatpush1.bf16.msra.mxu0 0
        %1049 = vmatprep.subr.bf16.mxu0 0
        %1050 = vmatpush1.bf16.msra.mxu0 0
        %1051 = vmatprep.subr.bf16.mxu0 0
        %1052 = vmatpush1.bf16.msra.mxu0 0
        %1053 = vmatprep.subr.bf16.mxu0 0
        %1054 = vmatpush1.bf16.msra.mxu0 0
        %1055 = vmatprep.subr.bf16.mxu0 0
        %1056 = vmatpush1.bf16.msra.mxu0 0
        %1057 = vmatprep.subr.bf16.mxu0 0
        %1058 = vmatpush1.bf16.msra.mxu0 0
        %1059 = vmatprep.subr.bf16.mxu0 0
        %1060 = vmatpush1.bf16.msra.mxu0 0
        %1061 = vmatprep.subr.bf16.mxu0 0
        %1062 = vmatpush1.bf16.msra.mxu0 0
        %1063 = vmatprep.subr.bf16.mxu0 0
        %1064 = vmatpush1.bf16.msra.mxu0 0
        %1065 = vmatprep.subr.bf16.mxu0 0
        %1066 = vmatpush1.bf16.msra.mxu0 0
        %1067 = vmatprep.subr.bf16.mxu0 0
        %1068 = vmatpush1.bf16.msra.mxu0 0
        %1069 = vmatprep.subr.bf16.mxu0 0
        %1070 = vmatpush1.bf16.msra.mxu0 0
        %1071 = vmatprep.mubr.bf16.mxu0 0
        %1072 = vmatmul.mubr.bf16.gmra.mrb[0].mxu0 %v1034
        %v1073 = vpop.f32.mrb[0].mxu0
        %v1074 = vadd.f32 0.0, %v1073
        %v1075 = vpop.f32.mrb[0].mxu0
        %v1076 = vpop.f32.mrb[0].mxu0
        %v1077 = vpop.f32.mrb[0].mxu0
        %1078 = vdwg.mxu0
        %v1079 = vadd.f32 %v982, %v1028
        %v1080 = vadd.f32 %v983, %v1074
        %1081 = vst.msk [vmem:[#allocation5] sm:$0xff] %vm829, %v1079
        %1082 = vst.msk [vmem:[#allocation5 + $0x8] sm:$0xff] %vm829, %v1080
        %1083 = vst.msk [vmem:[#allocation3] sm:$0xff] %vm967, %v931
        %1084 = vst.msk [vmem:[#allocation3 + $0x8] sm:$0xff] %vm967, %v932
        %p1085 = scmp.eq.s32.totalorder %s39, 2
        // Predicated region
        $region97: #{tpu_custom_call.1} parent=55 // pred_check
          %p1086 = pneg %p1085
        $region98: #{tpu_custom_call.1} parent=55 // pred_check_branch
          %1088 = sbr.rel (%p1086) target = $region100
        $region99: #{tpu_custom_call.1} parent=55 // pred_region
          %v1089 = vld [vmem:[#allocation5] sm:$0xff]
          %v1090 = vld [vmem:[#allocation5 + $0x8] sm:$0xff]
          %v1091 = vld [vmem:[#allocation4] sm:$0xff]
          %v1092 = vld [vmem:[#allocation4 + $0x8] sm:$0xff]
          %v1093 = vrcp.pop %v1091
          %v1094 = vrcp.pop %v1092
          %1096 = vset.pattern.permute.xlu0 0
          %1097 = vperm.xlu0 %1096, %v1093
          %v1098 = vpop.permute.xlu0 %1097
          %1101 = vset.pattern.permute.xlu0 0
          %1102 = vperm.xlu0 %1101, %v1094
          %v1103 = vpop.permute.xlu0 %1102
          %v1105 = vmul.f32 %v1089, %v1098
          %v1106 = vmul.f32 %v1090, %v1103
          %v1107 = vpack.c.bf16 %v1105, %v1105
          %v1108 = vpack.c.bf16 %v1106, %v1106
          %1110 = vrot.lane.b32.xlu0 %v1108, 32
          %v1111 = vpop.permute.xlu0 %1110
          %v1114 = vsel %vm829, %v1107, %v1111
          %v1115 = vld [vmem:[#allocation18] sm:$0xf]
          %v1116 = vld [vmem:[#allocation18 + $0x4] sm:$0xf]
          %v1117 = vld [vmem:[#allocation18 + $0x8] sm:$0xf]
          %v1118 = vld [vmem:[#allocation18 + $0xc] sm:$0xf]
          %v1119 = vld [vmem:[#allocation18 + $0x10] sm:$0xf]
          %v1120 = vld [vmem:[#allocation18 + $0x14] sm:$0xf]
          %v1121 = vld [vmem:[#allocation18 + $0x18] sm:$0xf]
          %v1122 = vld [vmem:[#allocation18 + $0x1c] sm:$0xf]
          %v1123 = vld [vmem:[#allocation20] sm:$0x1]
          %v1125 = vlaneseq
          %v1126 = vshrl.u32 %v1125, 7
          %v1127 = vsub.s32 0, %v1126
          %v1128 = vrot.slane %v1123, %v1127
          %v1138 = vunpack.c.l.b16 %v1115
          %v1139 = vunpack.c.l.b16 %v1116
          %v1140 = vunpack.c.l.b16 %v1117
          %v1141 = vunpack.c.l.b16 %v1118
          %v1142 = vunpack.c.l.b16 %v1119
          %v1143 = vunpack.c.l.b16 %v1120
          %v1144 = vunpack.c.l.b16 %v1121
          %v1145 = vunpack.c.l.b16 %v1122
          %v1146 = vpack.c.b16 %v1139, %v1138
          %v1147 = vpack.c.b16 %v1141, %v1140
          %v1148 = vpack.c.b16 %v1143, %v1142
          %v1149 = vpack.c.b16 %v1145, %v1144
          %v1154 = vsel %vm642, %v1114, 0
          %1156 = vmatprep.subr.bf16.mxu0 0
          %1157 = vmatpush1.bf16.msra.mxu0 %v1146
          %1158 = vmatprep.subr.bf16.mxu0 0
          %1159 = vmatpush1.bf16.msra.mxu0 %v1147
          %1160 = vmatprep.subr.bf16.mxu0 0
          %1161 = vmatpush1.bf16.msra.mxu0 %v1148
          %1162 = vmatprep.subr.bf16.mxu0 0
          %1163 = vmatpush1.bf16.msra.mxu0 %v1149
          %1164 = vmatprep.subr.bf16.mxu0 0
          %1165 = vmatpush1.bf16.msra.mxu0 0
          %1166 = vmatprep.subr.bf16.mxu0 0
          %1167 = vmatpush1.bf16.msra.mxu0 0
          %1168 = vmatprep.subr.bf16.mxu0 0
          %1169 = vmatpush1.bf16.msra.mxu0 0
          %1170 = vmatprep.subr.bf16.mxu0 0
          %1171 = vmatpush1.bf16.msra.mxu0 0
          %1172 = vmatprep.subr.bf16.mxu0 0
          %1173 = vmatpush1.bf16.msra.mxu0 0
          %1174 = vmatprep.subr.bf16.mxu0 0
          %1175 = vmatpush1.bf16.msra.mxu0 0
          %1176 = vmatprep.subr.bf16.mxu0 0
          %1177 = vmatpush1.bf16.msra.mxu0 0
          %1178 = vmatprep.subr.bf16.mxu0 0
          %1179 = vmatpush1.bf16.msra.mxu0 0
          %1180 = vmatprep.subr.bf16.mxu0 0
          %1181 = vmatpush1.bf16.msra.mxu0 0
          %1182 = vmatprep.subr.bf16.mxu0 0
          %1183 = vmatpush1.bf16.msra.mxu0 0
          %1184 = vmatprep.subr.bf16.mxu0 0
          %1185 = vmatpush1.bf16.msra.mxu0 0
          %1186 = vmatprep.subr.bf16.mxu0 0
          %1187 = vmatpush1.bf16.msra.mxu0 0
          %1188 = vmatprep.mubr.bf16.mxu0 0
          %1189 = vmatmul.mubr.bf16.gmra.mrb[0].mxu0 %v1154
          %v1190 = vpop.f32.mrb[0].mxu0
          %v1191 = vadd.f32 %v1128, %v1190
          %v1192 = vpop.f32.mrb[0].mxu0
          %v1193 = vpop.f32.mrb[0].mxu0
          %v1194 = vpop.f32.mrb[0].mxu0
          %1195 = vdwg.mxu0
          %v1196 = vld [vmem:[%s432] sm:$0xff]
          %v1197 = vadd.f32 %v1191, %v1196
          %1198 = vst.msk [vmem:[%s508] sm:$0xff] %vm642, %v1197
        $region100: #{tpu_custom_call.1} parent=55 // pred_fallthru
          _
        %s1199 = sand.u32 %s264, 1
        %s1200 = scalar_lea.sflag [#allocation8], %s1199
        %s1201 = sand.u32 %s264, 1
        %s1202 = smul.addr %s1201, 8
        %s1203 = scalar_lea.vmem [#allocation21], %s1202
        // Predicated region
        $region101: #{tpu_custom_call.1} parent=55 // pred_check
          %p1204 = pneg %p274
        $region102: #{tpu_custom_call.1} parent=55 // pred_check_branch
          %1206 = sbr.rel (%p1204) target = $region104
        $region103: #{tpu_custom_call.1} parent=55 // pred_region
          %s1208 = ssub.s32 128, 128
          %1209 = vsyncadd %s1200, %s1208
          %s1210 = smul.addr %s37, 3
          %s1211 = sadd.s32 %s38, %s1210
          %s1212 = smul.addr %s1211, 128
          %s1213 = scalar_lea.hbm %s9, %s1212
          %s1215 = sshll.u32 %s1203, 4
          %s1216 = int_to_ptr.vmem [resolvable:$true] %s1215
          %1218 = dma.vmem_to_hbm [thread:$0]  %s1216, 128, %s1213, %s1200
        $region104: #{tpu_custom_call.1} parent=55 // pred_fallthru
          _
      $region56: #{tpu_custom_call.1} parent=5 // pred_fallthru
        _
      %p1219 = scmp.le.s32.totalorder 2, %s27
      // Predicated region
      $region105: #{tpu_custom_call.1} parent=5 // pred_check
        %p1220 = pneg %p1219
      $region106: #{tpu_custom_call.1} parent=5 // pred_check_branch
        %1222 = sbr.rel (%p1220) target = $region108
      $region107: #{tpu_custom_call.1} parent=5 // pred_region
        %s1223 = ssub.s32 %s27, 2
        // Predicated region
        $region109: #{tpu_custom_call.1} parent=107 // pred_check
          %p1224 = pneg %p280
        $region110: #{tpu_custom_call.1} parent=107 // pred_check_branch
          %1226 = sbr.rel (%p1224) target = $region112
        $region111: #{tpu_custom_call.1} parent=107 // pred_region
          %s1227 = sand.u32 %s265, 1
          %s1228 = scalar_lea.sflag [#allocation8], %s1227
          %s1229 = sand.u32 %s265, 1
          %s1230 = smul.addr %s1229, 8
          %s1231 = scalar_lea.vmem [#allocation21], %s1230
          %1232 = dma.done %s1228, 128
        $region112: #{tpu_custom_call.1} parent=107 // pred_fallthru
          _
      $region108: #{tpu_custom_call.1} parent=5 // pred_fallthru
        _
    $region6: #{tpu_custom_call.1} parent=1 // loop_footer
      %s31 = sadd.s32 1, %s27
    $region7: #{tpu_custom_call.1} parent=1 // loop_footer_branch
      %26 = sbr.rel target = $region3
    $region8: #{tpu_custom_call.1} parent=1 // loop_exit
      _
    %1233 = vsyncpa [#allocation7], 1
    %s1234 = scalar_lea.sflag [#allocation7], 1
    %1235 = vsyncpa %s1234, 1
    %1236 = vsyncpa [#allocation10], 1
    %s1237 = scalar_lea.sflag [#allocation10], 1
    %1238 = vsyncpa %s1237, 1
    %1239 = vsyncpa [#allocation13], 1
    %1240 = vsyncpa [#allocation16], 1
    %1241 = vsyncpa [#allocation19], 1
    %1242 = vsyncpa [#allocation8], 1
    %s1243 = scalar_lea.sflag [#allocation8], 1
    %1244 = vsyncpa %s1243, 1

</llo_original>
